<compile_context>
chip_gen: v7x
topology: tpu7x:2x2x1
jax: 0.10.0
libtpu: 0.0.40
codegen_flags: <defaults>
</compile_context>

<pallas_src>
import functools

import jax
import jax.numpy as jnp
from jax import lax
from jax.experimental import pallas as pl
from jax.experimental.pallas import tpu as pltpu


def _round_up(x, m):
    return (x + m - 1) // m * m


def _vmem_limit_bytes():
    """Generation-aware VMEM budget: ~half of physical, capped at 64 MiB."""
    try:
        cap = int(pltpu.get_tpu_info().vmem_capacity_bytes)
    except Exception:  # pragma: no cover - conservative fallback
        cap = 64 * 1024 * 1024
    return max(16 * 1024 * 1024, min(cap // 2, 64 * 1024 * 1024))


def _epilogue(B, D, ex, ey, ez, mask_raw, out_ref):
    """Shared norm / distance epilogue + packed lane-dense output writeback.

    ex/ey/ez : (B, Dp) f32 embeddings (bias already added)
    mask_raw : (B, Dp) f32 gathered (un-ReLUed) condition masks
    out_ref  : (B, 128) f32 packed output slab
    """
    mask = jnp.maximum(mask_raw, 0.0)               # learnedmask=True -> ReLU
    mex = ex * mask
    mey = ey * mask
    mez = ez * mask

    Dp = ex.shape[1]
    # Padded embedding / mask lanes are exactly zero (weight / bias / mask are zero
    # padded), so the norms need no lane masking; only the +eps term of
    # pairwise_distance must be restricted to the real D lanes to match torch.
    lane_ok = lax.broadcasted_iota(jnp.int32, (B, Dp), 1) < D
    eps = jnp.float32(1e-6)
    da = jnp.where(lane_ok, mex - mey + eps, 0.0)
    db = jnp.where(lane_ok, mex - mez + eps, 0.0)
    dist_a = jnp.sqrt(jnp.sum(da * da, axis=1, keepdims=True))   # (B, 1)
    dist_b = jnp.sqrt(jnp.sum(db * db, axis=1, keepdims=True))   # (B, 1)

    # mask.norm(1) is identical for the three ConditionalSimNet calls, so the
    # reference's (m + m + m) / 3 is just the L1 norm once.
    mask_norm = jnp.sum(jnp.abs(mask))
    embed_norm = (jnp.sqrt(jnp.sum(ex * ex)) +
                  jnp.sqrt(jnp.sum(ey * ey)) +
                  jnp.sqrt(jnp.sum(ez * ez))) / 3.0
    mask_embed_norm = (jnp.sqrt(jnp.sum(mex * mex)) +
                       jnp.sqrt(jnp.sum(mey * mey)) +
                       jnp.sqrt(jnp.sum(mez * mez))) / 3.0

    # One lane-dense (B, 128) slab -> a single output writeback:
    #   col 0 -> dist_a[row], col 1 -> dist_b[row],
    #   cols 2/3/4 -> mask_norm / embed_norm / mask_embed_norm (read back from row 0).
    col = lax.broadcasted_iota(jnp.int32, (B, 128), 1)
    slab = jnp.where(col == 0, dist_a,
           jnp.where(col == 1, dist_b,
           jnp.where(col == 2, mask_norm,
           jnp.where(col == 3, embed_norm,
           jnp.where(col == 4, mask_embed_norm, 0.0)))))
    out_ref[...] = slab


def _csnet_single_kernel(B, D, x_ref, y_ref, z_ref, w_ref, b_ref, mask_ref, out_ref):
    """No-grid path: everything resident in VMEM, one dot per image, no accumulator."""
    w = w_ref[...]                                   # (Fp, Dp) bf16
    b = b_ref[...]                                   # (1, Dp)  f32
    ex = jnp.dot(x_ref[...].astype(jnp.bfloat16), w,
                 preferred_element_type=jnp.float32) + b
    ey = jnp.dot(y_ref[...].astype(jnp.bfloat16), w,
                 preferred_element_type=jnp.float32) + b
    ez = jnp.dot(z_ref[...].astype(jnp.bfloat16), w,
                 preferred_element_type=jnp.float32) + b
    _epilogue(B, D, ex, ey, ez, mask_ref[...], out_ref)


def _csnet_grid_kernel(B, D, x_ref, y_ref, z_ref, w_ref, b_ref, mask_ref, out_ref,
                       accx_ref, accy_ref, accz_ref):
    """Fallback path for large F: grid over the reduction (F) axis.

    x/y/z_ref : (B, tk)  f32   activation tiles (cast to bf16 in-kernel)
    w_ref     : (tk, Dp) bf16  embedding weight tile (dominant HBM stream)
    b_ref     : (1, Dp)  f32   bias (resident)
    mask_ref  : (B, Dp)  f32   gathered condition masks (resident)
    out_ref   : (B, 128) f32   packed output slab
    acc*_ref  : (B, Dp)  f32   VMEM accumulators
    """
    k = pl.program_id(0)

    @pl.when(k == 0)
    def _init():
        accx_ref[...] = jnp.zeros_like(accx_ref)
        accy_ref[...] = jnp.zeros_like(accy_ref)
        accz_ref[...] = jnp.zeros_like(accz_ref)

    w = w_ref[...]
    accx_ref[...] += jnp.dot(x_ref[...].astype(jnp.bfloat16), w,
                             preferred_element_type=jnp.float32)
    accy_ref[...] += jnp.dot(y_ref[...].astype(jnp.bfloat16), w,
                             preferred_element_type=jnp.float32)
    accz_ref[...] += jnp.dot(z_ref[...].astype(jnp.bfloat16), w,
                             preferred_element_type=jnp.float32)

    @pl.when(k == pl.num_programs(0) - 1)
    def _finalize():
        b = b_ref[...]
        _epilogue(B, D, accx_ref[...] + b, accy_ref[...] + b, accz_ref[...] + b,
                  mask_ref[...], out_ref)


def prepare_csnet_params(w, b, masks_weight):
    """Pad + cast the embedding / mask parameters ONCE (do this outside the per-call
    path and cache the result): the per-call kernel then streams the bf16 weight
    directly with no extra f32 read + bf16 write pass over W."""
    F, D = w.shape
    Dp = _round_up(D, 128)
    Fp = _round_up(F, 128)
    wp = jnp.pad(w, ((0, Fp - F), (0, Dp - D))).astype(jnp.bfloat16)          # (Fp, Dp)
    bp = jnp.pad(b.reshape(1, D), ((0, 0), (0, Dp - D))).astype(jnp.float32)  # (1, Dp)
    mp = jnp.pad(masks_weight, ((0, 0), (0, Dp - D))).astype(jnp.float32)     # (nc, Dp)
    return {"w": wp, "b": bp, "masks": mp, "d": int(D), "f": int(F)}


def csnet_forward(x, y, z, c, params, *, force_grid=False, tk=None):
    """CSNet.forward -> (dist_a, dist_b, mask_norm, embed_norm, mask_embed_norm)."""
    B = x.shape[0]
    D = params["d"]
    F = params["f"]
    wp, bp = params["w"], params["b"]
    Fp, Dp = wp.shape

    # nn.Embedding lookup (parameter gather glue); ReLU stays inside the kernel.
    maskp = jnp.take(params["masks"], c, axis=0)        # (B, Dp) f32

    # Flatten the images (pure reshape -- no concat / cast pass over activations; the
    # F padding below is a no-op whenever F is already 128-aligned, as here).
    def flat(img):
        v = img.reshape(B, -1)
        if Fp != F:
            v = jnp.pad(v, ((0, 0), (0, Fp - F)))
        return v

    xf, yf, zf = flat(x), flat(y), flat(z)

    vmem_limit = _vmem_limit_bytes()

    # VMEM needed by the single-step (no-grid) path: whole arrays resident.
    single_bytes = (Fp * Dp * 2            # bf16 weight
                    + 3 * B * Fp * 4       # f32 activations
                    + (B + 1) * Dp * 4     # mask + bias
                    + B * 128 * 4)         # packed output slab
    use_single = (not force_grid) and (2 * single_bytes <= vmem_limit)

    out_shape = jax.ShapeDtypeStruct((B, 128), jnp.float32)

    if use_single:
        out = pl.pallas_call(
            functools.partial(_csnet_single_kernel, B, D),
            out_shape=out_shape,
            in_specs=[pl.BlockSpec(memory_space=pltpu.MemorySpace.VMEM)
                      for _ in range(6)],
            out_specs=pl.BlockSpec(memory_space=pltpu.MemorySpace.VMEM),
            compiler_params=pltpu.CompilerParams(vmem_limit_bytes=int(vmem_limit)),
        )(xf, yf, zf, wp, bp, maskp)
    else:
        # Reduction grid over F.  tk = largest 128-multiple dividing Fp whose
        # double-buffered activation + weight tiles fit in ~half the VMEM budget.
        resident = 4 * (3 * B * Dp + B * Dp + Dp + B * 128)
        per_tk = 2 * (3 * B * 4 + Dp * 2)              # double-buffered bytes per unit tk
        cap_tk = max(128, (vmem_limit // 2 - resident) // per_tk)
        if tk is not None:
            cap_tk = min(cap_tk, tk)
        n128 = Fp // 128
        cap_blocks = max(1, int(cap_tk) // 128)
        best = 1
        for cand in range(1, n128 + 1):
            if n128 % cand == 0 and cand <= cap_blocks:
                best = cand
        tk_eff = best * 128
        grid = (Fp // tk_eff,)

        out = pl.pallas_call(
            functools.partial(_csnet_grid_kernel, B, D),
            out_shape=out_shape,
            grid_spec=pltpu.PrefetchScalarGridSpec(
                num_scalar_prefetch=0,
                grid=grid,
                in_specs=[
                    pl.BlockSpec((B, tk_eff), lambda k: (0, k)),    # x tile
                    pl.BlockSpec((B, tk_eff), lambda k: (0, k)),    # y tile
                    pl.BlockSpec((B, tk_eff), lambda k: (0, k)),    # z tile
                    pl.BlockSpec((tk_eff, Dp), lambda k: (k, 0)),   # weight tile
                    pl.BlockSpec((1, Dp), lambda k: (0, 0)),        # bias (resident)
                    pl.BlockSpec((B, Dp), lambda k: (0, 0)),        # masks (resident)
                ],
                out_specs=pl.BlockSpec((B, 128), lambda k: (0, 0)),
                scratch_shapes=[
                    pltpu.VMEM((B, Dp), jnp.float32),
                    pltpu.VMEM((B, Dp), jnp.float32),
                    pltpu.VMEM((B, Dp), jnp.float32),
                ],
            ),
            compiler_params=pltpu.CompilerParams(
                dimension_semantics=("arbitrary",),
                vmem_limit_bytes=int(vmem_limit),
            ),
        )(xf, yf, zf, wp, bp, maskp)

    dist_a = out[:, 0]
    dist_b = out[:, 1]
    mask_norm = out[0, 2]
    embed_norm = out[0, 3]
    mask_embed_norm = out[0, 4]
    return dist_a, dist_b, mask_norm, embed_norm, mask_embed_norm


def _reference(x, y, z, c, w, b, masks_weight):
    """Pure-JAX reference (same bf16-rounded activations / weight as the kernel)."""
    B = x.shape[0]
    f32 = jnp.float32

    def emb(img):
        flat = img.reshape(B, -1).astype(jnp.bfloat16).astype(f32)
        return flat @ w.astype(jnp.bfloat16).astype(f32) + b

    ex, ey, ez = emb(x), emb(y), emb(z)
    mask = jax.nn.relu(jnp.take(masks_weight, c, axis=0))
    mex, mey, mez = ex * mask, ey * mask, ez * mask
    eps = 1e-6
    dist_a = jnp.sqrt(jnp.sum((mex - mey + eps) ** 2, axis=1))
    dist_b = jnp.sqrt(jnp.sum((mex - mez + eps) ** 2, axis=1))
    l2 = lambda a: jnp.sqrt(jnp.sum(a * a))
    mask_norm = jnp.sum(jnp.abs(mask))
    embed_norm = (l2(ex) + l2(ey) + l2(ez)) / 3.0
    mask_embed_norm = (l2(mex) + l2(mey) + l2(mez)) / 3.0
    return dist_a, dist_b, mask_norm, embed_norm, mask_embed_norm


if __name__ == "__main__":
    # Small shapes consistent with the module's forward.
    B, C, H, W = 2, 4, 16, 16
    n_conditions = 4
    dim_embed = 128
    F_flat = C * H * W

    key = jax.random.PRNGKey(0)
    kx, ky, kz, kc, kw, kb, km = jax.random.split(key, 7)

    x = jax.random.normal(kx, (B, C, H, W), dtype=jnp.float32)
    y = jax.random.normal(ky, (B, C, H, W), dtype=jnp.float32)
    z = jax.random.normal(kz, (B, C, H, W), dtype=jnp.float32)
    c = jax.random.randint(kc, (B,), 0, n_conditions, dtype=jnp.int32)

    # embeddingnet parameters (linear projection stand-in), deterministic init.
    w_emb = jax.random.normal(kw, (F_flat, dim_embed), dtype=jnp.float32) * 0.02
    b_emb = jax.random.normal(kb, (dim_embed,), dtype=jnp.float32) * 0.01

    # masks.weight.data.normal_(0.9, 0.7)   (learnedmask=True, prein=False)
    masks_weight = 0.9 + 0.7 * jax.random.normal(
        km, (n_conditions, dim_embed), dtype=jnp.float32)

    # One-time parameter preparation (cached across forward calls).
    params = prepare_csnet_params(w_emb, b_emb, masks_weight)
    params = jax.tree_util.tree_map(
        lambda a: jax.block_until_ready(a) if isinstance(a, jax.Array) else a, params)

    refs = _reference(x, y, z, c, w_emb, b_emb, masks_weight)

    # 1) Fast path: single step, no grid.
    outs = csnet_forward(x, y, z, c, params)
    outs = jax.block_until_ready(outs)
    dist_a, dist_b, mask_norm, embed_norm, mask_embed_norm = outs
    assert dist_a.shape == (B,) and dist_b.shape == (B,)
    assert mask_norm.shape == () and embed_norm.shape == () and mask_embed_norm.shape == ()
    for got, want in zip(outs, refs):
        assert jnp.allclose(got, want, rtol=5e-3, atol=5e-3), (got, want)

    # 2) Fallback path: reduction grid over F (exercised here with a small forced tk).
    outs_g = csnet_forward(x, y, z, c, params, force_grid=True, tk=256)
    outs_g = jax.block_until_ready(outs_g)
    for got, want in zip(outs_g, refs):
        assert jnp.allclose(got, want, rtol=5e-3, atol=5e-3), (got, want)

    print("KERNEL_OK")
</pallas_src>

<mosaic_0001>
module attributes {stable_mosaic.version = 11 : i64} {
  func.func @_csnet_single_kernel(%arg0: memref<2x1024xf32, #tpu.memory_space<vmem>>, %arg1: memref<2x1024xf32, #tpu.memory_space<vmem>>, %arg2: memref<2x1024xf32, #tpu.memory_space<vmem>>, %arg3: memref<1024x128xbf16, #tpu.memory_space<vmem>>, %arg4: memref<1x128xf32, #tpu.memory_space<vmem>>, %arg5: memref<2x128xf32, #tpu.memory_space<vmem>>, %arg6: memref<2x128xf32, #tpu.memory_space<vmem>>) attributes {dimension_semantics = [], scalar_prefetch = 0 : i64, scratch_operands = 0 : i64, tpu.core_type = #tpu.core_type<tc>} {
    %c0 = arith.constant 0 : index
    %c0_0 = arith.constant 0 : index
    %0 = vector.load %arg3[%c0, %c0_0] : memref<1024x128xbf16, #tpu.memory_space<vmem>>, vector<1024x128xbf16>
    %c0_1 = arith.constant 0 : index
    %c0_2 = arith.constant 0 : index
    %1 = vector.load %arg4[%c0_1, %c0_2] : memref<1x128xf32, #tpu.memory_space<vmem>>, vector<1x128xf32>
    %c0_3 = arith.constant 0 : index
    %c0_4 = arith.constant 0 : index
    %2 = vector.load %arg0[%c0_3, %c0_4] : memref<2x1024xf32, #tpu.memory_space<vmem>>, vector<2x1024xf32>
    %3 = arith.truncf %2 : vector<2x1024xf32> to vector<2x1024xbf16>
    %cst = arith.constant dense<0.000000e+00> : vector<2x128xf32>
    %4 = tpu.matmul %3, %0, %cst {dimension_numbers = #tpu.dot_dimension_numbers<[1], [0], [0], [1], [0, 0, 1, 1], [], []>} : vector<2x1024xbf16>, vector<1024x128xbf16>, vector<2x128xf32> -> vector<2x128xf32>
    %5 = vector.broadcast %1 : vector<1x128xf32> to vector<2x128xf32>
    %6 = arith.addf %4, %5 : vector<2x128xf32>
    %c0_5 = arith.constant 0 : index
    %c0_6 = arith.constant 0 : index
    %7 = vector.load %arg1[%c0_5, %c0_6] : memref<2x1024xf32, #tpu.memory_space<vmem>>, vector<2x1024xf32>
    %8 = arith.truncf %7 : vector<2x1024xf32> to vector<2x1024xbf16>
    %cst_7 = arith.constant dense<0.000000e+00> : vector<2x128xf32>
    %9 = tpu.matmul %8, %0, %cst_7 {dimension_numbers = #tpu.dot_dimension_numbers<[1], [0], [0], [1], [0, 0, 1, 1], [], []>} : vector<2x1024xbf16>, vector<1024x128xbf16>, vector<2x128xf32> -> vector<2x128xf32>
    %10 = vector.broadcast %1 : vector<1x128xf32> to vector<2x128xf32>
    %11 = arith.addf %9, %10 : vector<2x128xf32>
    %c0_8 = arith.constant 0 : index
    %c0_9 = arith.constant 0 : index
    %12 = vector.load %arg2[%c0_8, %c0_9] : memref<2x1024xf32, #tpu.memory_space<vmem>>, vector<2x1024xf32>
    %13 = arith.truncf %12 : vector<2x1024xf32> to vector<2x1024xbf16>
    %cst_10 = arith.constant dense<0.000000e+00> : vector<2x128xf32>
    %14 = tpu.matmul %13, %0, %cst_10 {dimension_numbers = #tpu.dot_dimension_numbers<[1], [0], [0], [1], [0, 0, 1, 1], [], []>} : vector<2x1024xbf16>, vector<1024x128xbf16>, vector<2x128xf32> -> vector<2x128xf32>
    %15 = vector.broadcast %1 : vector<1x128xf32> to vector<2x128xf32>
    %16 = arith.addf %14, %15 : vector<2x128xf32>
    %c0_11 = arith.constant 0 : index
    %c0_12 = arith.constant 0 : index
    %17 = vector.load %arg5[%c0_11, %c0_12] : memref<2x128xf32, #tpu.memory_space<vmem>>, vector<2x128xf32>
    %cst_13 = arith.constant 0.000000e+00 : f32
    %18 = vector.broadcast %cst_13 : f32 to vector<2x128xf32>
    %19 = arith.maximumf %17, %18 : vector<2x128xf32>
    %20 = arith.mulf %6, %19 : vector<2x128xf32>
    %21 = arith.mulf %11, %19 : vector<2x128xf32>
    %22 = arith.mulf %16, %19 : vector<2x128xf32>
    %23 = tpu.iota {dimensions = array<i32: 1>} : vector<2x128xi32>
    %c128_i32 = arith.constant 128 : i32
    %24 = vector.broadcast %c128_i32 : i32 to vector<2x128xi32>
    %25 = arith.cmpi slt, %23, %24 : vector<2x128xi32>
    %26 = arith.subf %20, %21 : vector<2x128xf32>
    %cst_14 = arith.constant 9.99999997E-7 : f32
    %27 = vector.broadcast %cst_14 : f32 to vector<2x128xf32>
    %28 = arith.addf %26, %27 : vector<2x128xf32>
    %cst_15 = arith.constant 0.000000e+00 : f32
    %29 = vector.broadcast %cst_15 : f32 to vector<2x128xf32>
    %30 = arith.select %25, %28, %29 : vector<2x128xi1>, vector<2x128xf32>
    %31 = arith.subf %20, %22 : vector<2x128xf32>
    %cst_16 = arith.constant 9.99999997E-7 : f32
    %32 = vector.broadcast %cst_16 : f32 to vector<2x128xf32>
    %33 = arith.addf %31, %32 : vector<2x128xf32>
    %cst_17 = arith.constant 0.000000e+00 : f32
    %34 = vector.broadcast %cst_17 : f32 to vector<2x128xf32>
    %35 = arith.select %25, %33, %34 : vector<2x128xi1>, vector<2x128xf32>
    %36 = arith.mulf %30, %30 : vector<2x128xf32>
    %cst_18 = arith.constant dense<0.000000e+00> : vector<2xf32>
    %37 = vector.multi_reduction <add>, %36, %cst_18 [1] : vector<2x128xf32> to vector<2xf32>
    %38 = vector.shape_cast %37 : vector<2xf32> to vector<2x1xf32>
    %39 = math.sqrt %38 : vector<2x1xf32>
    %40 = arith.mulf %35, %35 : vector<2x128xf32>
    %cst_19 = arith.constant dense<0.000000e+00> : vector<2xf32>
    %41 = vector.multi_reduction <add>, %40, %cst_19 [1] : vector<2x128xf32> to vector<2xf32>
    %42 = vector.shape_cast %41 : vector<2xf32> to vector<2x1xf32>
    %43 = math.sqrt %42 : vector<2x1xf32>
    %44 = math.absf %19 : vector<2x128xf32>
    %45 = vector.shape_cast %44 : vector<2x128xf32> to vector<1x2x128xf32>
    %cst_20 = arith.constant dense<0.000000e+00> : vector<1xf32>
    %46 = vector.multi_reduction <add>, %45, %cst_20 [1, 2] : vector<1x2x128xf32> to vector<1xf32>
    %47 = vector.shape_cast %46 : vector<1xf32> to vector<1x1x1xf32>
    %48 = vector.extract %47[0, 0, 0] : f32 from vector<1x1x1xf32>
    %49 = arith.mulf %6, %6 : vector<2x128xf32>
    %50 = vector.shape_cast %49 : vector<2x128xf32> to vector<1x2x128xf32>
    %cst_21 = arith.constant dense<0.000000e+00> : vector<1xf32>
    %51 = vector.multi_reduction <add>, %50, %cst_21 [1, 2] : vector<1x2x128xf32> to vector<1xf32>
    %52 = vector.shape_cast %51 : vector<1xf32> to vector<1x1x1xf32>
    %53 = vector.extract %52[0, 0, 0] : f32 from vector<1x1x1xf32>
    %54 = math.sqrt %53 : f32
    %55 = arith.mulf %11, %11 : vector<2x128xf32>
    %56 = vector.shape_cast %55 : vector<2x128xf32> to vector<1x2x128xf32>
    %cst_22 = arith.constant dense<0.000000e+00> : vector<1xf32>
    %57 = vector.multi_reduction <add>, %56, %cst_22 [1, 2] : vector<1x2x128xf32> to vector<1xf32>
    %58 = vector.shape_cast %57 : vector<1xf32> to vector<1x1x1xf32>
    %59 = vector.extract %58[0, 0, 0] : f32 from vector<1x1x1xf32>
    %60 = math.sqrt %59 : f32
    %61 = arith.addf %54, %60 : f32
    %62 = arith.mulf %16, %16 : vector<2x128xf32>
    %63 = vector.shape_cast %62 : vector<2x128xf32> to vector<1x2x128xf32>
    %cst_23 = arith.constant dense<0.000000e+00> : vector<1xf32>
    %64 = vector.multi_reduction <add>, %63, %cst_23 [1, 2] : vector<1x2x128xf32> to vector<1xf32>
    %65 = vector.shape_cast %64 : vector<1xf32> to vector<1x1x1xf32>
    %66 = vector.extract %65[0, 0, 0] : f32 from vector<1x1x1xf32>
    %67 = math.sqrt %66 : f32
    %68 = arith.addf %61, %67 : f32
    %cst_24 = arith.constant 3.000000e+00 : f32
    %69 = arith.divf %68, %cst_24 : f32
    %70 = arith.mulf %20, %20 : vector<2x128xf32>
    %71 = vector.shape_cast %70 : vector<2x128xf32> to vector<1x2x128xf32>
    %cst_25 = arith.constant dense<0.000000e+00> : vector<1xf32>
    %72 = vector.multi_reduction <add>, %71, %cst_25 [1, 2] : vector<1x2x128xf32> to vector<1xf32>
    %73 = vector.shape_cast %72 : vector<1xf32> to vector<1x1x1xf32>
    %74 = vector.extract %73[0, 0, 0] : f32 from vector<1x1x1xf32>
    %75 = math.sqrt %74 : f32
    %76 = arith.mulf %21, %21 : vector<2x128xf32>
    %77 = vector.shape_cast %76 : vector<2x128xf32> to vector<1x2x128xf32>
    %cst_26 = arith.constant dense<0.000000e+00> : vector<1xf32>
    %78 = vector.multi_reduction <add>, %77, %cst_26 [1, 2] : vector<1x2x128xf32> to vector<1xf32>
    %79 = vector.shape_cast %78 : vector<1xf32> to vector<1x1x1xf32>
    %80 = vector.extract %79[0, 0, 0] : f32 from vector<1x1x1xf32>
    %81 = math.sqrt %80 : f32
    %82 = arith.addf %75, %81 : f32
    %83 = arith.mulf %22, %22 : vector<2x128xf32>
    %84 = vector.shape_cast %83 : vector<2x128xf32> to vector<1x2x128xf32>
    %cst_27 = arith.constant dense<0.000000e+00> : vector<1xf32>
    %85 = vector.multi_reduction <add>, %84, %cst_27 [1, 2] : vector<1x2x128xf32> to vector<1xf32>
    %86 = vector.shape_cast %85 : vector<1xf32> to vector<1x1x1xf32>
    %87 = vector.extract %86[0, 0, 0] : f32 from vector<1x1x1xf32>
    %88 = math.sqrt %87 : f32
    %89 = arith.addf %82, %88 : f32
    %cst_28 = arith.constant 3.000000e+00 : f32
    %90 = arith.divf %89, %cst_28 : f32
    %91 = tpu.iota {dimensions = array<i32: 1>} : vector<2x128xi32>
    %c0_i32 = arith.constant 0 : i32
    %92 = vector.broadcast %c0_i32 : i32 to vector<2x128xi32>
    %93 = arith.cmpi eq, %91, %92 : vector<2x128xi32>
    %c1_i32 = arith.constant 1 : i32
    %94 = vector.broadcast %c1_i32 : i32 to vector<2x128xi32>
    %95 = arith.cmpi eq, %91, %94 : vector<2x128xi32>
    %c2_i32 = arith.constant 2 : i32
    %96 = vector.broadcast %c2_i32 : i32 to vector<2x128xi32>
    %97 = arith.cmpi eq, %91, %96 : vector<2x128xi32>
    %c3_i32 = arith.constant 3 : i32
    %98 = vector.broadcast %c3_i32 : i32 to vector<2x128xi32>
    %99 = arith.cmpi eq, %91, %98 : vector<2x128xi32>
    %c4_i32 = arith.constant 4 : i32
    %100 = vector.broadcast %c4_i32 : i32 to vector<2x128xi32>
    %101 = arith.cmpi eq, %91, %100 : vector<2x128xi32>
    %cst_29 = arith.constant 0.000000e+00 : f32
    %102 = vector.broadcast %90 : f32 to vector<2x128xf32>
    %103 = vector.broadcast %cst_29 : f32 to vector<2x128xf32>
    %104 = arith.select %101, %102, %103 : vector<2x128xi1>, vector<2x128xf32>
    %105 = vector.broadcast %69 : f32 to vector<2x128xf32>
    %106 = arith.select %99, %105, %104 : vector<2x128xi1>, vector<2x128xf32>
    %107 = vector.broadcast %48 : f32 to vector<2x128xf32>
    %108 = arith.select %97, %107, %106 : vector<2x128xi1>, vector<2x128xf32>
    %109 = vector.shape_cast %43 : vector<2x1xf32> to vector<2x1xf32>
    %110 = vector.broadcast %109 : vector<2x1xf32> to vector<2x128xf32>
    %111 = arith.select %95, %110, %108 : vector<2x128xi1>, vector<2x128xf32>
    %112 = vector.shape_cast %39 : vector<2x1xf32> to vector<2x1xf32>
    %113 = vector.broadcast %112 : vector<2x1xf32> to vector<2x128xf32>
    %114 = arith.select %93, %113, %111 : vector<2x128xi1>, vector<2x128xf32>
    %c0_30 = arith.constant 0 : index
    %c0_31 = arith.constant 0 : index
    %115 = vector.load %arg6[%c0_30, %c0_31] : memref<2x128xf32, #tpu.memory_space<vmem>>, vector<2x128xf32>
    tpu.vector_store %arg6[%c0_30, %c0_31], %114 {strides = array<i32>} : memref<2x128xf32, #tpu.memory_space<vmem>>, vector<2x128xf32>,
    return
  }
}

</mosaic_0001>

<llo_original>
// kernel: tpu_custom_call.1
$region0: #{tpu_custom_call.1}
  #allocation0 [shape = 'u32[]', space=smem, size = 0x4, offset = 0x4, fixed_abs, tag = 'smem constant byte address 0x4 - core index']
  #allocation1 [shape = 'u32[144,128]{1,0:T(1,128)}', space=vmem, size = 0x12000, scoped, tag = 'internal scratch']
  %s0 = inlined_call_operand.hbm [shape: f32[2,1024], index: 0, kind: input, shape index: {}]
  %s1 = inlined_call_operand.hbm [shape: f32[2,1024], index: 1, kind: input, shape index: {}]
  %s2 = inlined_call_operand.hbm [shape: f32[2,1024], index: 2, kind: input, shape index: {}]
  %s3 = inlined_call_operand.hbm [shape: bf16[1024,128], index: 3, kind: input, shape index: {}]
  %s4 = inlined_call_operand.vmem [shape: f32[1,128], index: 4, kind: input, shape index: {}]
  %s5 = inlined_call_operand.vmem [shape: f32[2,128], index: 5, kind: input, shape index: {}]
  %s6 = inlined_call_operand.hbm [shape: f32[2,128], index: 6, kind: output, shape index: {}]
  %s7 = sld [smem:[#allocation0]]
  $region50: #{tpu_custom_call.1} parent=0
    _
  %s9 = ssub.s32 1, %s7
  %s10 = scalar_select 0, %s9, %s7
  $region1: #{tpu_custom_call.1} parent=0
    #allocation2 [shape = 'u8[8192]{0}', space=vmem, size = 0x2000, scoped, tag = 'input window, operand 0, single buffered']
    #allocation3 [shape = 's32[1]{0}', space=sflag, size = 0x4, scoped, tag = 'scoped memory for tpu_custom_call.1']
    #allocation4 [shape = 's32[1]{0}', space=sflag, size = 0x4, scoped, tag = 'scoped memory for tpu_custom_call.1']
    #allocation5 [shape = 'u8[8192]{0}', space=vmem, size = 0x2000, scoped, tag = 'input window, operand 1, single buffered']
    #allocation6 [shape = 's32[1]{0}', space=sflag, size = 0x4, scoped, tag = 'scoped memory for tpu_custom_call.1']
    #allocation7 [shape = 'u8[8192]{0}', space=vmem, size = 0x2000, scoped, tag = 'input window, operand 2, single buffered']
    #allocation8 [shape = 'u8[262144]{0}', space=vmem, size = 0x40000, scoped, tag = 'input window, operand 3, single buffered']
    #allocation9 [shape = 's32[1]{0}', space=sflag, size = 0x4, scoped, tag = 'scoped memory for tpu_custom_call.1']
    #allocation10 [shape = 'u8[1024]{0}', space=vmem, size = 0x400, scoped, tag = 'output window, operand 0, single buffered']
    %11 = vsyncpa [#allocation3], 0
    %12 = vsyncpa [#allocation6], 0
    %13 = vsyncpa [#allocation9], 0
    %14 = vsyncpa [#allocation4], 0
    // Predicated region
    $region2: #{tpu_custom_call.1} parent=1 // pred_check
      _
    $region3: #{tpu_custom_call.1} parent=1 // pred_check_branch
      %16 = sbr.rel (0) target = $region5
    $region4: #{tpu_custom_call.1} parent=1 // pred_region
      %s18 = ssub.s32 256, 256
      %19 = vsyncadd [#allocation3], %s18
      %s21 = sshll.u32 [#allocation2], 4
      %s22 = int_to_ptr.vmem [resolvable:$true] %s21
      %24 = dma.hbm_to_vmem [thread:$0]  %s0, 256, %s22, [#allocation3]
    $region5: #{tpu_custom_call.1} parent=1 // pred_fallthru
      _
    // Predicated region
    $region6: #{tpu_custom_call.1} parent=1 // pred_check
      _
    $region7: #{tpu_custom_call.1} parent=1 // pred_check_branch
      %26 = sbr.rel (0) target = $region9
    $region8: #{tpu_custom_call.1} parent=1 // pred_region
      %s28 = ssub.s32 256, 256
      %29 = vsyncadd [#allocation6], %s28
      %s31 = sshll.u32 [#allocation5], 4
      %s32 = int_to_ptr.vmem [resolvable:$true] %s31
      %34 = dma.hbm_to_vmem [thread:$0]  %s1, 256, %s32, [#allocation6]
    $region9: #{tpu_custom_call.1} parent=1 // pred_fallthru
      _
    // Predicated region
    $region10: #{tpu_custom_call.1} parent=1 // pred_check
      _
    $region11: #{tpu_custom_call.1} parent=1 // pred_check_branch
      %36 = sbr.rel (0) target = $region13
    $region12: #{tpu_custom_call.1} parent=1 // pred_region
      %s38 = ssub.s32 256, 256
      %39 = vsyncadd [#allocation6], %s38
      %s41 = sshll.u32 [#allocation7], 4
      %s42 = int_to_ptr.vmem [resolvable:$true] %s41
      %44 = dma.hbm_to_vmem [thread:$0]  %s2, 256, %s42, [#allocation6]
    $region13: #{tpu_custom_call.1} parent=1 // pred_fallthru
      _
    // Predicated region
    $region14: #{tpu_custom_call.1} parent=1 // pred_check
      _
    $region15: #{tpu_custom_call.1} parent=1 // pred_check_branch
      %46 = sbr.rel (0) target = $region17
    $region16: #{tpu_custom_call.1} parent=1 // pred_region
      %s48 = ssub.s32 8192, 8192
      %49 = vsyncadd [#allocation9], %s48
      %s50 = sshll.u32 [#allocation8], 4
      %s51 = int_to_ptr.vmem [resolvable:$true] %s50
      %56 = dma.hbm_to_vmem [thread:$0]  %s3, 8192, %s51, [#allocation9], 64, 64, 4
    $region17: #{tpu_custom_call.1} parent=1 // pred_fallthru
      _
    // Predicated region
    $region18: #{tpu_custom_call.1} parent=1 // pred_check
      _
    $region19: #{tpu_custom_call.1} parent=1 // pred_check_branch
      %58 = sbr.rel (0) target = $region21
    $region20: #{tpu_custom_call.1} parent=1 // pred_region
      _
    $region21: #{tpu_custom_call.1} parent=1 // pred_fallthru
      _
    // Predicated region
    $region22: #{tpu_custom_call.1} parent=1 // pred_check
      _
    $region23: #{tpu_custom_call.1} parent=1 // pred_check_branch
      %60 = sbr.rel (0) target = $region25
    $region24: #{tpu_custom_call.1} parent=1 // pred_region
      _
    $region25: #{tpu_custom_call.1} parent=1 // pred_fallthru
      _
    // Predicated region
    $region26: #{tpu_custom_call.1} parent=1 // pred_check
      _
    $region27: #{tpu_custom_call.1} parent=1 // pred_check_branch
      %62 = sbr.rel (0) target = $region29
    $region28: #{tpu_custom_call.1} parent=1 // pred_region
      %63 = dma.done [#allocation3], 256
    $region29: #{tpu_custom_call.1} parent=1 // pred_fallthru
      _
    // Predicated region
    $region30: #{tpu_custom_call.1} parent=1 // pred_check
      _
    $region31: #{tpu_custom_call.1} parent=1 // pred_check_branch
      %65 = sbr.rel (0) target = $region33
    $region32: #{tpu_custom_call.1} parent=1 // pred_region
      %66 = dma.done [#allocation6], 256
    $region33: #{tpu_custom_call.1} parent=1 // pred_fallthru
      _
    // Predicated region
    $region34: #{tpu_custom_call.1} parent=1 // pred_check
      _
    $region35: #{tpu_custom_call.1} parent=1 // pred_check_branch
      %68 = sbr.rel (0) target = $region37
    $region36: #{tpu_custom_call.1} parent=1 // pred_region
      %69 = dma.done [#allocation6], 256
    $region37: #{tpu_custom_call.1} parent=1 // pred_fallthru
      _
    // Predicated region
    $region38: #{tpu_custom_call.1} parent=1 // pred_check
      _
    $region39: #{tpu_custom_call.1} parent=1 // pred_check_branch
      %71 = sbr.rel (0) target = $region41
    $region40: #{tpu_custom_call.1} parent=1 // pred_region
      %72 = dma.done [#allocation9], 8192
    $region41: #{tpu_custom_call.1} parent=1 // pred_fallthru
      _
    %v74 = vld [vmem:[#allocation8] sm:$0xf]
    %v75 = vld [vmem:[#allocation8 + $0x4] sm:$0xf]
    %v76 = vld [vmem:[#allocation8 + $0x8] sm:$0xf]
    %v77 = vld [vmem:[#allocation8 + $0xc] sm:$0xf]
    %v78 = vld [vmem:[#allocation8 + $0x10] sm:$0xf]
    %v79 = vld [vmem:[#allocation8 + $0x14] sm:$0xf]
    %v80 = vld [vmem:[#allocation8 + $0x18] sm:$0xf]
    %v81 = vld [vmem:[#allocation8 + $0x1c] sm:$0xf]
    %v82 = vld [vmem:[#allocation8 + $0x20] sm:$0xf]
    %v83 = vld [vmem:[#allocation8 + $0x24] sm:$0xf]
    %v84 = vld [vmem:[#allocation8 + $0x28] sm:$0xf]
    %v85 = vld [vmem:[#allocation8 + $0x2c] sm:$0xf]
    %v86 = vld [vmem:[#allocation8 + $0x30] sm:$0xf]
    %v87 = vld [vmem:[#allocation8 + $0x34] sm:$0xf]
    %v88 = vld [vmem:[#allocation8 + $0x38] sm:$0xf]
    %v89 = vld [vmem:[#allocation8 + $0x3c] sm:$0xf]
    %v90 = vld [vmem:[#allocation8 + $0x40] sm:$0xf]
    %v91 = vld [vmem:[#allocation8 + $0x44] sm:$0xf]
    %v92 = vld [vmem:[#allocation8 + $0x48] sm:$0xf]
    %v93 = vld [vmem:[#allocation8 + $0x4c] sm:$0xf]
    %v94 = vld [vmem:[#allocation8 + $0x50] sm:$0xf]
    %v95 = vld [vmem:[#allocation8 + $0x54] sm:$0xf]
    %v96 = vld [vmem:[#allocation8 + $0x58] sm:$0xf]
    %v97 = vld [vmem:[#allocation8 + $0x5c] sm:$0xf]
    %v98 = vld [vmem:[#allocation8 + $0x60] sm:$0xf]
    %v99 = vld [vmem:[#allocation8 + $0x64] sm:$0xf]
    %v100 = vld [vmem:[#allocation8 + $0x68] sm:$0xf]
    %v101 = vld [vmem:[#allocation8 + $0x6c] sm:$0xf]
    %v102 = vld [vmem:[#allocation8 + $0x70] sm:$0xf]
    %v103 = vld [vmem:[#allocation8 + $0x74] sm:$0xf]
    %v104 = vld [vmem:[#allocation8 + $0x78] sm:$0xf]
    %v105 = vld [vmem:[#allocation8 + $0x7c] sm:$0xf]
    %v106 = vld [vmem:[#allocation8 + $0x80] sm:$0xf]
    %v107 = vld [vmem:[#allocation8 + $0x84] sm:$0xf]
    %v108 = vld [vmem:[#allocation8 + $0x88] sm:$0xf]
    %v109 = vld [vmem:[#allocation8 + $0x8c] sm:$0xf]
    %v110 = vld [vmem:[#allocation8 + $0x90] sm:$0xf]
    %v111 = vld [vmem:[#allocation8 + $0x94] sm:$0xf]
    %v112 = vld [vmem:[#allocation8 + $0x98] sm:$0xf]
    %v113 = vld [vmem:[#allocation8 + $0x9c] sm:$0xf]
    %v114 = vld [vmem:[#allocation8 + $0xa0] sm:$0xf]
    %v115 = vld [vmem:[#allocation8 + $0xa4] sm:$0xf]
    %v116 = vld [vmem:[#allocation8 + $0xa8] sm:$0xf]
    %v117 = vld [vmem:[#allocation8 + $0xac] sm:$0xf]
    %v118 = vld [vmem:[#allocation8 + $0xb0] sm:$0xf]
    %v119 = vld [vmem:[#allocation8 + $0xb4] sm:$0xf]
    %v120 = vld [vmem:[#allocation8 + $0xb8] sm:$0xf]
    %v121 = vld [vmem:[#allocation8 + $0xbc] sm:$0xf]
    %v122 = vld [vmem:[#allocation8 + $0xc0] sm:$0xf]
    %v123 = vld [vmem:[#allocation8 + $0xc4] sm:$0xf]
    %v124 = vld [vmem:[#allocation8 + $0xc8] sm:$0xf]
    %v125 = vld [vmem:[#allocation8 + $0xcc] sm:$0xf]
    %v126 = vld [vmem:[#allocation8 + $0xd0] sm:$0xf]
    %v127 = vld [vmem:[#allocation8 + $0xd4] sm:$0xf]
    %v128 = vld [vmem:[#allocation8 + $0xd8] sm:$0xf]
    %v129 = vld [vmem:[#allocation8 + $0xdc] sm:$0xf]
    %v130 = vld [vmem:[#allocation8 + $0xe0] sm:$0xf]
    %v131 = vld [vmem:[#allocation8 + $0xe4] sm:$0xf]
    %v132 = vld [vmem:[#allocation8 + $0xe8] sm:$0xf]
    %v133 = vld [vmem:[#allocation8 + $0xec] sm:$0xf]
    %v134 = vld [vmem:[#allocation8 + $0xf0] sm:$0xf]
    %v135 = vld [vmem:[#allocation8 + $0xf4] sm:$0xf]
    %v136 = vld [vmem:[#allocation8 + $0xf8] sm:$0xf]
    %v137 = vld [vmem:[#allocation8 + $0xfc] sm:$0xf]
    %v138 = vld [vmem:[#allocation8 + $0x100] sm:$0xf]
    %v139 = vld [vmem:[#allocation8 + $0x104] sm:$0xf]
    %v140 = vld [vmem:[#allocation8 + $0x108] sm:$0xf]
    %v141 = vld [vmem:[#allocation8 + $0x10c] sm:$0xf]
    %v142 = vld [vmem:[#allocation8 + $0x110] sm:$0xf]
    %v143 = vld [vmem:[#allocation8 + $0x114] sm:$0xf]
    %v144 = vld [vmem:[#allocation8 + $0x118] sm:$0xf]
    %v145 = vld [vmem:[#allocation8 + $0x11c] sm:$0xf]
    %v146 = vld [vmem:[#allocation8 + $0x120] sm:$0xf]
    %v147 = vld [vmem:[#allocation8 + $0x124] sm:$0xf]
    %v148 = vld [vmem:[#allocation8 + $0x128] sm:$0xf]
    %v149 = vld [vmem:[#allocation8 + $0x12c] sm:$0xf]
    %v150 = vld [vmem:[#allocation8 + $0x130] sm:$0xf]
    %v151 = vld [vmem:[#allocation8 + $0x134] sm:$0xf]
    %v152 = vld [vmem:[#allocation8 + $0x138] sm:$0xf]
    %v153 = vld [vmem:[#allocation8 + $0x13c] sm:$0xf]
    %v154 = vld [vmem:[#allocation8 + $0x140] sm:$0xf]
    %v155 = vld [vmem:[#allocation8 + $0x144] sm:$0xf]
    %v156 = vld [vmem:[#allocation8 + $0x148] sm:$0xf]
    %v157 = vld [vmem:[#allocation8 + $0x14c] sm:$0xf]
    %v158 = vld [vmem:[#allocation8 + $0x150] sm:$0xf]
    %v159 = vld [vmem:[#allocation8 + $0x154] sm:$0xf]
    %v160 = vld [vmem:[#allocation8 + $0x158] sm:$0xf]
    %v161 = vld [vmem:[#allocation8 + $0x15c] sm:$0xf]
    %v162 = vld [vmem:[#allocation8 + $0x160] sm:$0xf]
    %v163 = vld [vmem:[#allocation8 + $0x164] sm:$0xf]
    %v164 = vld [vmem:[#allocation8 + $0x168] sm:$0xf]
    %v165 = vld [vmem:[#allocation8 + $0x16c] sm:$0xf]
    %v166 = vld [vmem:[#allocation8 + $0x170] sm:$0xf]
    %v167 = vld [vmem:[#allocation8 + $0x174] sm:$0xf]
    %v168 = vld [vmem:[#allocation8 + $0x178] sm:$0xf]
    %v169 = vld [vmem:[#allocation8 + $0x17c] sm:$0xf]
    %v170 = vld [vmem:[#allocation8 + $0x180] sm:$0xf]
    %v171 = vld [vmem:[#allocation8 + $0x184] sm:$0xf]
    %v172 = vld [vmem:[#allocation8 + $0x188] sm:$0xf]
    %v173 = vld [vmem:[#allocation8 + $0x18c] sm:$0xf]
    %v174 = vld [vmem:[#allocation8 + $0x190] sm:$0xf]
    %v175 = vld [vmem:[#allocation8 + $0x194] sm:$0xf]
    %v176 = vld [vmem:[#allocation8 + $0x198] sm:$0xf]
    %v177 = vld [vmem:[#allocation8 + $0x19c] sm:$0xf]
    %v178 = vld [vmem:[#allocation8 + $0x1a0] sm:$0xf]
    %v179 = vld [vmem:[#allocation8 + $0x1a4] sm:$0xf]
    %v180 = vld [vmem:[#allocation8 + $0x1a8] sm:$0xf]
    %v181 = vld [vmem:[#allocation8 + $0x1ac] sm:$0xf]
    %v182 = vld [vmem:[#allocation8 + $0x1b0] sm:$0xf]
    %v183 = vld [vmem:[#allocation8 + $0x1b4] sm:$0xf]
    %v184 = vld [vmem:[#allocation8 + $0x1b8] sm:$0xf]
    %v185 = vld [vmem:[#allocation8 + $0x1bc] sm:$0xf]
    %v186 = vld [vmem:[#allocation8 + $0x1c0] sm:$0xf]
    %v187 = vld [vmem:[#allocation8 + $0x1c4] sm:$0xf]
    %v188 = vld [vmem:[#allocation8 + $0x1c8] sm:$0xf]
    %v189 = vld [vmem:[#allocation8 + $0x1cc] sm:$0xf]
    %v190 = vld [vmem:[#allocation8 + $0x1d0] sm:$0xf]
    %v191 = vld [vmem:[#allocation8 + $0x1d4] sm:$0xf]
    %v192 = vld [vmem:[#allocation8 + $0x1d8] sm:$0xf]
    %v193 = vld [vmem:[#allocation8 + $0x1dc] sm:$0xf]
    %v194 = vld [vmem:[#allocation8 + $0x1e0] sm:$0xf]
    %v195 = vld [vmem:[#allocation8 + $0x1e4] sm:$0xf]
    %v196 = vld [vmem:[#allocation8 + $0x1e8] sm:$0xf]
    %v197 = vld [vmem:[#allocation8 + $0x1ec] sm:$0xf]
    %v198 = vld [vmem:[#allocation8 + $0x1f0] sm:$0xf]
    %v199 = vld [vmem:[#allocation8 + $0x1f4] sm:$0xf]
    %v200 = vld [vmem:[#allocation8 + $0x1f8] sm:$0xf]
    %v201 = vld [vmem:[#allocation8 + $0x1fc] sm:$0xf]
    %v202 = vld [vmem:[%s4] sm:$0x1]
    %v203 = vld [vmem:[#allocation2] sm:$0xff]
    %v204 = vld [vmem:[#allocation2 + $0x8] sm:$0xff]
    %v207 = vcombine.high %v203, %v203
    %v209 = vunpack.c.l.s4 1983009808
    %v210 = vunpack.c.0.s8 %v209
    %v211 = vlaneseq
    %v212 = vshrl.u32 %v211, 7
    %v213 = vsub.s32 %v210, %v212
    %v214 = vrot.slane %v203, %v213
    %v216 = vunpack.c.l.s4 1983009808
    %v217 = vunpack.c.0.s8 %v216
    %v218 = vlaneseq
    %v219 = vshrl.u32 %v218, 7
    %v220 = vsub.s32 %v217, %v219
    %v221 = vrot.slane %v207, %v220
    %v222 = vcombine.high %v214, %v214
    %v223 = vcombine.high %v221, %v221
    %v224 = vcombine.high %v204, %v204
    %v226 = vunpack.c.l.s4 1983009808
    %v227 = vunpack.c.0.s8 %v226
    %v228 = vlaneseq
    %v229 = vshrl.u32 %v228, 7
    %v230 = vsub.s32 %v227, %v229
    %v231 = vrot.slane %v204, %v230
    %v233 = vunpack.c.l.s4 1983009808
    %v234 = vunpack.c.0.s8 %v233
    %v235 = vlaneseq
    %v236 = vshrl.u32 %v235, 7
    %v237 = vsub.s32 %v234, %v236
    %v238 = vrot.slane %v224, %v237
    %v239 = vcombine.high %v231, %v231
    %v240 = vcombine.high %v238, %v238
    %v249 = vpack.c.bf16 %v214, %v214
    %v250 = vpack.c.bf16 %v222, %v222
    %v251 = vpack.c.bf16 %v221, %v221
    %v252 = vpack.c.bf16 %v223, %v223
    %v253 = vpack.c.bf16 %v231, %v231
    %v254 = vpack.c.bf16 %v239, %v239
    %v255 = vpack.c.bf16 %v238, %v238
    %v256 = vpack.c.bf16 %v240, %v240
    %v258 = vlaneseq
    %v259 = vshrl.u32 %v258, 7
    %v260 = vsub.s32 0, %v259
    %v261 = vrot.slane %v202, %v260
    %v391 = vunpack.c.l.b16 %v74
    %v392 = vunpack.c.l.b16 %v75
    %v393 = vunpack.c.l.b16 %v76
    %v394 = vunpack.c.l.b16 %v77
    %v395 = vunpack.c.l.b16 %v78
    %v396 = vunpack.c.l.b16 %v79
    %v397 = vunpack.c.l.b16 %v80
    %v398 = vunpack.c.l.b16 %v81
    %v399 = vunpack.c.l.b16 %v82
    %v400 = vunpack.c.l.b16 %v83
    %v401 = vunpack.c.l.b16 %v84
    %v402 = vunpack.c.l.b16 %v85
    %v403 = vunpack.c.l.b16 %v86
    %v404 = vunpack.c.l.b16 %v87
    %v405 = vunpack.c.l.b16 %v88
    %v406 = vunpack.c.l.b16 %v89
    %v407 = vunpack.c.l.b16 %v90
    %v408 = vunpack.c.l.b16 %v91
    %v409 = vunpack.c.l.b16 %v92
    %v410 = vunpack.c.l.b16 %v93
    %v411 = vunpack.c.l.b16 %v94
    %v412 = vunpack.c.l.b16 %v95
    %v413 = vunpack.c.l.b16 %v96
    %v414 = vunpack.c.l.b16 %v97
    %v415 = vunpack.c.l.b16 %v98
    %v416 = vunpack.c.l.b16 %v99
    %v417 = vunpack.c.l.b16 %v100
    %v418 = vunpack.c.l.b16 %v101
    %v419 = vunpack.c.l.b16 %v102
    %v420 = vunpack.c.l.b16 %v103
    %v421 = vunpack.c.l.b16 %v104
    %v422 = vunpack.c.l.b16 %v105
    %v423 = vunpack.c.l.b16 %v106
    %v424 = vunpack.c.l.b16 %v107
    %v425 = vunpack.c.l.b16 %v108
    %v426 = vunpack.c.l.b16 %v109
    %v427 = vunpack.c.l.b16 %v110
    %v428 = vunpack.c.l.b16 %v111
    %v429 = vunpack.c.l.b16 %v112
    %v430 = vunpack.c.l.b16 %v113
    %v431 = vunpack.c.l.b16 %v114
    %v432 = vunpack.c.l.b16 %v115
    %v433 = vunpack.c.l.b16 %v116
    %v434 = vunpack.c.l.b16 %v117
    %v435 = vunpack.c.l.b16 %v118
    %v436 = vunpack.c.l.b16 %v119
    %v437 = vunpack.c.l.b16 %v120
    %v438 = vunpack.c.l.b16 %v121
    %v439 = vunpack.c.l.b16 %v122
    %v440 = vunpack.c.l.b16 %v123
    %v441 = vunpack.c.l.b16 %v124
    %v442 = vunpack.c.l.b16 %v125
    %v443 = vunpack.c.l.b16 %v126
    %v444 = vunpack.c.l.b16 %v127
    %v445 = vunpack.c.l.b16 %v128
    %v446 = vunpack.c.l.b16 %v129
    %v447 = vunpack.c.l.b16 %v130
    %v448 = vunpack.c.l.b16 %v131
    %v449 = vunpack.c.l.b16 %v132
    %v450 = vunpack.c.l.b16 %v133
    %v451 = vunpack.c.l.b16 %v134
    %v452 = vunpack.c.l.b16 %v135
    %v453 = vunpack.c.l.b16 %v136
    %v454 = vunpack.c.l.b16 %v137
    %v455 = vunpack.c.l.b16 %v138
    %v456 = vunpack.c.l.b16 %v139
    %v457 = vunpack.c.l.b16 %v140
    %v458 = vunpack.c.l.b16 %v141
    %v459 = vunpack.c.l.b16 %v142
    %v460 = vunpack.c.l.b16 %v143
    %v461 = vunpack.c.l.b16 %v144
    %v462 = vunpack.c.l.b16 %v145
    %v463 = vunpack.c.l.b16 %v146
    %v464 = vunpack.c.l.b16 %v147
    %v465 = vunpack.c.l.b16 %v148
    %v466 = vunpack.c.l.b16 %v149
    %v467 = vunpack.c.l.b16 %v150
    %v468 = vunpack.c.l.b16 %v151
    %v469 = vunpack.c.l.b16 %v152
    %v470 = vunpack.c.l.b16 %v153
    %v471 = vunpack.c.l.b16 %v154
    %v472 = vunpack.c.l.b16 %v155
    %v473 = vunpack.c.l.b16 %v156
    %v474 = vunpack.c.l.b16 %v157
    %v475 = vunpack.c.l.b16 %v158
    %v476 = vunpack.c.l.b16 %v159
    %v477 = vunpack.c.l.b16 %v160
    %v478 = vunpack.c.l.b16 %v161
    %v479 = vunpack.c.l.b16 %v162
    %v480 = vunpack.c.l.b16 %v163
    %v481 = vunpack.c.l.b16 %v164
    %v482 = vunpack.c.l.b16 %v165
    %v483 = vunpack.c.l.b16 %v166
    %v484 = vunpack.c.l.b16 %v167
    %v485 = vunpack.c.l.b16 %v168
    %v486 = vunpack.c.l.b16 %v169
    %v487 = vunpack.c.l.b16 %v170
    %v488 = vunpack.c.l.b16 %v171
    %v489 = vunpack.c.l.b16 %v172
    %v490 = vunpack.c.l.b16 %v173
    %v491 = vunpack.c.l.b16 %v174
    %v492 = vunpack.c.l.b16 %v175
    %v493 = vunpack.c.l.b16 %v176
    %v494 = vunpack.c.l.b16 %v177
    %v495 = vunpack.c.l.b16 %v178
    %v496 = vunpack.c.l.b16 %v179
    %v497 = vunpack.c.l.b16 %v180
    %v498 = vunpack.c.l.b16 %v181
    %v499 = vunpack.c.l.b16 %v182
    %v500 = vunpack.c.l.b16 %v183
    %v501 = vunpack.c.l.b16 %v184
    %v502 = vunpack.c.l.b16 %v185
    %v503 = vunpack.c.l.b16 %v186
    %v504 = vunpack.c.l.b16 %v187
    %v505 = vunpack.c.l.b16 %v188
    %v506 = vunpack.c.l.b16 %v189
    %v507 = vunpack.c.l.b16 %v190
    %v508 = vunpack.c.l.b16 %v191
    %v509 = vunpack.c.l.b16 %v192
    %v510 = vunpack.c.l.b16 %v193
    %v511 = vunpack.c.l.b16 %v194
    %v512 = vunpack.c.l.b16 %v195
    %v513 = vunpack.c.l.b16 %v196
    %v514 = vunpack.c.l.b16 %v197
    %v515 = vunpack.c.l.b16 %v198
    %v516 = vunpack.c.l.b16 %v199
    %v517 = vunpack.c.l.b16 %v200
    %v518 = vunpack.c.l.b16 %v201
    %v519 = vpack.c.b16 %v392, %v391
    %v520 = vpack.c.b16 %v394, %v393
    %v521 = vpack.c.b16 %v396, %v395
    %v522 = vpack.c.b16 %v398, %v397
    %v523 = vpack.c.b16 %v400, %v399
    %v524 = vpack.c.b16 %v402, %v401
    %v525 = vpack.c.b16 %v404, %v403
    %v526 = vpack.c.b16 %v406, %v405
    %v527 = vpack.c.b16 %v408, %v407
    %v528 = vpack.c.b16 %v410, %v409
    %v529 = vpack.c.b16 %v412, %v411
    %v530 = vpack.c.b16 %v414, %v413
    %v531 = vpack.c.b16 %v416, %v415
    %v532 = vpack.c.b16 %v418, %v417
    %v533 = vpack.c.b16 %v420, %v419
    %v534 = vpack.c.b16 %v422, %v421
    %v535 = vpack.c.b16 %v424, %v423
    %v536 = vpack.c.b16 %v426, %v425
    %v537 = vpack.c.b16 %v428, %v427
    %v538 = vpack.c.b16 %v430, %v429
    %v539 = vpack.c.b16 %v432, %v431
    %v540 = vpack.c.b16 %v434, %v433
    %v541 = vpack.c.b16 %v436, %v435
    %v542 = vpack.c.b16 %v438, %v437
    %v543 = vpack.c.b16 %v440, %v439
    %v544 = vpack.c.b16 %v442, %v441
    %v545 = vpack.c.b16 %v444, %v443
    %v546 = vpack.c.b16 %v446, %v445
    %v547 = vpack.c.b16 %v448, %v447
    %v548 = vpack.c.b16 %v450, %v449
    %v549 = vpack.c.b16 %v452, %v451
    %v550 = vpack.c.b16 %v454, %v453
    %v551 = vpack.c.b16 %v456, %v455
    %v552 = vpack.c.b16 %v458, %v457
    %v553 = vpack.c.b16 %v460, %v459
    %v554 = vpack.c.b16 %v462, %v461
    %v555 = vpack.c.b16 %v464, %v463
    %v556 = vpack.c.b16 %v466, %v465
    %v557 = vpack.c.b16 %v468, %v467
    %v558 = vpack.c.b16 %v470, %v469
    %v559 = vpack.c.b16 %v472, %v471
    %v560 = vpack.c.b16 %v474, %v473
    %v561 = vpack.c.b16 %v476, %v475
    %v562 = vpack.c.b16 %v478, %v477
    %v563 = vpack.c.b16 %v480, %v479
    %v564 = vpack.c.b16 %v482, %v481
    %v565 = vpack.c.b16 %v484, %v483
    %v566 = vpack.c.b16 %v486, %v485
    %v567 = vpack.c.b16 %v488, %v487
    %v568 = vpack.c.b16 %v490, %v489
    %v569 = vpack.c.b16 %v492, %v491
    %v570 = vpack.c.b16 %v494, %v493
    %v571 = vpack.c.b16 %v496, %v495
    %v572 = vpack.c.b16 %v498, %v497
    %v573 = vpack.c.b16 %v500, %v499
    %v574 = vpack.c.b16 %v502, %v501
    %v575 = vpack.c.b16 %v504, %v503
    %v576 = vpack.c.b16 %v506, %v505
    %v577 = vpack.c.b16 %v508, %v507
    %v578 = vpack.c.b16 %v510, %v509
    %v579 = vpack.c.b16 %v512, %v511
    %v580 = vpack.c.b16 %v514, %v513
    %v581 = vpack.c.b16 %v516, %v515
    %v582 = vpack.c.b16 %v518, %v517
    %647 = vmatprep.subr.bf16.mxu0 0
    %648 = vmatpush1.bf16.msra.mxu0 %v519
    %649 = vmatprep.subr.bf16.mxu0 0
    %650 = vmatpush1.bf16.msra.mxu0 %v520
    %651 = vmatprep.subr.bf16.mxu0 0
    %652 = vmatpush1.bf16.msra.mxu0 %v521
    %653 = vmatprep.subr.bf16.mxu0 0
    %654 = vmatpush1.bf16.msra.mxu0 %v522
    %655 = vmatprep.subr.bf16.mxu0 0
    %656 = vmatpush1.bf16.msra.mxu0 %v523
    %657 = vmatprep.subr.bf16.mxu0 0
    %658 = vmatpush1.bf16.msra.mxu0 %v524
    %659 = vmatprep.subr.bf16.mxu0 0
    %660 = vmatpush1.bf16.msra.mxu0 %v525
    %661 = vmatprep.subr.bf16.mxu0 0
    %662 = vmatpush1.bf16.msra.mxu0 %v526
    %663 = vmatprep.subr.bf16.mxu0 0
    %664 = vmatpush1.bf16.msra.mxu0 %v527
    %665 = vmatprep.subr.bf16.mxu0 0
    %666 = vmatpush1.bf16.msra.mxu0 %v528
    %667 = vmatprep.subr.bf16.mxu0 0
    %668 = vmatpush1.bf16.msra.mxu0 %v529
    %669 = vmatprep.subr.bf16.mxu0 0
    %670 = vmatpush1.bf16.msra.mxu0 %v530
    %671 = vmatprep.subr.bf16.mxu0 0
    %672 = vmatpush1.bf16.msra.mxu0 %v531
    %673 = vmatprep.subr.bf16.mxu0 0
    %674 = vmatpush1.bf16.msra.mxu0 %v532
    %675 = vmatprep.subr.bf16.mxu0 0
    %676 = vmatpush1.bf16.msra.mxu0 %v533
    %677 = vmatprep.subr.bf16.mxu0 0
    %678 = vmatpush1.bf16.msra.mxu0 %v534
    %679 = vmatprep.mubr.bf16.mxu0 %v250
    %680 = vmatmul.mubr.bf16.gmra.mrb[0].mxu0 %v249
    %v681 = vpop.f32.mrb[0].mxu0
    %v682 = vadd.f32 %v261, %v681
    %v683 = vpop.f32.mrb[0].mxu0
    %v684 = vpop.f32.mrb[0].mxu0
    %v685 = vpop.f32.mrb[0].mxu0
    %686 = vdwg.mxu0
    %687 = vmatprep.subr.bf16.mxu0 0
    %688 = vmatpush1.bf16.msra.mxu0 %v535
    %689 = vmatprep.subr.bf16.mxu0 0
    %690 = vmatpush1.bf16.msra.mxu0 %v536
    %691 = vmatprep.subr.bf16.mxu0 0
    %692 = vmatpush1.bf16.msra.mxu0 %v537
    %693 = vmatprep.subr.bf16.mxu0 0
    %694 = vmatpush1.bf16.msra.mxu0 %v538
    %695 = vmatprep.subr.bf16.mxu0 0
    %696 = vmatpush1.bf16.msra.mxu0 %v539
    %697 = vmatprep.subr.bf16.mxu0 0
    %698 = vmatpush1.bf16.msra.mxu0 %v540
    %699 = vmatprep.subr.bf16.mxu0 0
    %700 = vmatpush1.bf16.msra.mxu0 %v541
    %701 = vmatprep.subr.bf16.mxu0 0
    %702 = vmatpush1.bf16.msra.mxu0 %v542
    %703 = vmatprep.subr.bf16.mxu0 0
    %704 = vmatpush1.bf16.msra.mxu0 %v543
    %705 = vmatprep.subr.bf16.mxu0 0
    %706 = vmatpush1.bf16.msra.mxu0 %v544
    %707 = vmatprep.subr.bf16.mxu0 0
    %708 = vmatpush1.bf16.msra.mxu0 %v545
    %709 = vmatprep.subr.bf16.mxu0 0
    %710 = vmatpush1.bf16.msra.mxu0 %v546
    %711 = vmatprep.subr.bf16.mxu0 0
    %712 = vmatpush1.bf16.msra.mxu0 %v547
    %713 = vmatprep.subr.bf16.mxu0 0
    %714 = vmatpush1.bf16.msra.mxu0 %v548
    %715 = vmatprep.subr.bf16.mxu0 0
    %716 = vmatpush1.bf16.msra.mxu0 %v549
    %717 = vmatprep.subr.bf16.mxu0 0
    %718 = vmatpush1.bf16.msra.mxu0 %v550
    %719 = vmatprep.mubr.bf16.mxu0 %v252
    %720 = vmatmul.mubr.bf16.gmra.mrb[0].mxu0 %v251
    %v721 = vpop.f32.mrb[0].mxu0
    %v722 = vadd.f32 %v682, %v721
    %v723 = vpop.f32.mrb[0].mxu0
    %v724 = vpop.f32.mrb[0].mxu0
    %v725 = vpop.f32.mrb[0].mxu0
    %726 = vdwg.mxu0
    %727 = vmatprep.subr.bf16.mxu0 0
    %728 = vmatpush1.bf16.msra.mxu0 %v551
    %729 = vmatprep.subr.bf16.mxu0 0
    %730 = vmatpush1.bf16.msra.mxu0 %v552
    %731 = vmatprep.subr.bf16.mxu0 0
    %732 = vmatpush1.bf16.msra.mxu0 %v553
    %733 = vmatprep.subr.bf16.mxu0 0
    %734 = vmatpush1.bf16.msra.mxu0 %v554
    %735 = vmatprep.subr.bf16.mxu0 0
    %736 = vmatpush1.bf16.msra.mxu0 %v555
    %737 = vmatprep.subr.bf16.mxu0 0
    %738 = vmatpush1.bf16.msra.mxu0 %v556
    %739 = vmatprep.subr.bf16.mxu0 0
    %740 = vmatpush1.bf16.msra.mxu0 %v557
    %741 = vmatprep.subr.bf16.mxu0 0
    %742 = vmatpush1.bf16.msra.mxu0 %v558
    %743 = vmatprep.subr.bf16.mxu0 0
    %744 = vmatpush1.bf16.msra.mxu0 %v559
    %745 = vmatprep.subr.bf16.mxu0 0
    %746 = vmatpush1.bf16.msra.mxu0 %v560
    %747 = vmatprep.subr.bf16.mxu0 0
    %748 = vmatpush1.bf16.msra.mxu0 %v561
    %749 = vmatprep.subr.bf16.mxu0 0
    %750 = vmatpush1.bf16.msra.mxu0 %v562
    %751 = vmatprep.subr.bf16.mxu0 0
    %752 = vmatpush1.bf16.msra.mxu0 %v563
    %753 = vmatprep.subr.bf16.mxu0 0
    %754 = vmatpush1.bf16.msra.mxu0 %v564
    %755 = vmatprep.subr.bf16.mxu0 0
    %756 = vmatpush1.bf16.msra.mxu0 %v565
    %757 = vmatprep.subr.bf16.mxu0 0
    %758 = vmatpush1.bf16.msra.mxu0 %v566
    %759 = vmatprep.mubr.bf16.mxu0 %v254
    %760 = vmatmul.mubr.bf16.gmra.mrb[0].mxu0 %v253
    %v761 = vpop.f32.mrb[0].mxu0
    %v762 = vadd.f32 %v722, %v761
    %v763 = vpop.f32.mrb[0].mxu0
    %v764 = vpop.f32.mrb[0].mxu0
    %v765 = vpop.f32.mrb[0].mxu0
    %766 = vdwg.mxu0
    %767 = vmatprep.subr.bf16.mxu0 0
    %768 = vmatpush1.bf16.msra.mxu0 %v567
    %769 = vmatprep.subr.bf16.mxu0 0
    %770 = vmatpush1.bf16.msra.mxu0 %v568
    %771 = vmatprep.subr.bf16.mxu0 0
    %772 = vmatpush1.bf16.msra.mxu0 %v569
    %773 = vmatprep.subr.bf16.mxu0 0
    %774 = vmatpush1.bf16.msra.mxu0 %v570
    %775 = vmatprep.subr.bf16.mxu0 0
    %776 = vmatpush1.bf16.msra.mxu0 %v571
    %777 = vmatprep.subr.bf16.mxu0 0
    %778 = vmatpush1.bf16.msra.mxu0 %v572
    %779 = vmatprep.subr.bf16.mxu0 0
    %780 = vmatpush1.bf16.msra.mxu0 %v573
    %781 = vmatprep.subr.bf16.mxu0 0
    %782 = vmatpush1.bf16.msra.mxu0 %v574
    %783 = vmatprep.subr.bf16.mxu0 0
    %784 = vmatpush1.bf16.msra.mxu0 %v575
    %785 = vmatprep.subr.bf16.mxu0 0
    %786 = vmatpush1.bf16.msra.mxu0 %v576
    %787 = vmatprep.subr.bf16.mxu0 0
    %788 = vmatpush1.bf16.msra.mxu0 %v577
    %789 = vmatprep.subr.bf16.mxu0 0
    %790 = vmatpush1.bf16.msra.mxu0 %v578
    %791 = vmatprep.subr.bf16.mxu0 0
    %792 = vmatpush1.bf16.msra.mxu0 %v579
    %793 = vmatprep.subr.bf16.mxu0 0
    %794 = vmatpush1.bf16.msra.mxu0 %v580
    %795 = vmatprep.subr.bf16.mxu0 0
    %796 = vmatpush1.bf16.msra.mxu0 %v581
    %797 = vmatprep.subr.bf16.mxu0 0
    %798 = vmatpush1.bf16.msra.mxu0 %v582
    %799 = vmatprep.mubr.bf16.mxu0 %v256
    %800 = vmatmul.mubr.bf16.gmra.mrb[0].mxu0 %v255
    %v801 = vpop.f32.mrb[0].mxu0
    %v802 = vadd.f32 %v762, %v801
    %v803 = vpop.f32.mrb[0].mxu0
    %v804 = vpop.f32.mrb[0].mxu0
    %v805 = vpop.f32.mrb[0].mxu0
    %806 = vdwg.mxu0
    %v807 = vld [vmem:[#allocation5] sm:$0xff]
    %v808 = vld [vmem:[#allocation5 + $0x8] sm:$0xff]
    %v811 = vcombine.high %v807, %v807
    %v813 = vunpack.c.l.s4 1983009808
    %v814 = vunpack.c.0.s8 %v813
    %v815 = vlaneseq
    %v816 = vshrl.u32 %v815, 7
    %v817 = vsub.s32 %v814, %v816
    %v818 = vrot.slane %v807, %v817
    %v820 = vunpack.c.l.s4 1983009808
    %v821 = vunpack.c.0.s8 %v820
    %v822 = vlaneseq
    %v823 = vshrl.u32 %v822, 7
    %v824 = vsub.s32 %v821, %v823
    %v825 = vrot.slane %v811, %v824
    %v826 = vcombine.high %v818, %v818
    %v827 = vcombine.high %v825, %v825
    %v828 = vcombine.high %v808, %v808
    %v830 = vunpack.c.l.s4 1983009808
    %v831 = vunpack.c.0.s8 %v830
    %v832 = vlaneseq
    %v833 = vshrl.u32 %v832, 7
    %v834 = vsub.s32 %v831, %v833
    %v835 = vrot.slane %v808, %v834
    %v837 = vunpack.c.l.s4 1983009808
    %v838 = vunpack.c.0.s8 %v837
    %v839 = vlaneseq
    %v840 = vshrl.u32 %v839, 7
    %v841 = vsub.s32 %v838, %v840
    %v842 = vrot.slane %v828, %v841
    %v843 = vcombine.high %v835, %v835
    %v844 = vcombine.high %v842, %v842
    %v853 = vpack.c.bf16 %v818, %v818
    %v854 = vpack.c.bf16 %v826, %v826
    %v855 = vpack.c.bf16 %v825, %v825
    %v856 = vpack.c.bf16 %v827, %v827
    %v857 = vpack.c.bf16 %v835, %v835
    %v858 = vpack.c.bf16 %v843, %v843
    %v859 = vpack.c.bf16 %v842, %v842
    %v860 = vpack.c.bf16 %v844, %v844
    %861 = vmatprep.subr.bf16.mxu0 0
    %862 = vmatpush1.bf16.msra.mxu0 %v519
    %863 = vmatprep.subr.bf16.mxu0 0
    %864 = vmatpush1.bf16.msra.mxu0 %v520
    %865 = vmatprep.subr.bf16.mxu0 0
    %866 = vmatpush1.bf16.msra.mxu0 %v521
    %867 = vmatprep.subr.bf16.mxu0 0
    %868 = vmatpush1.bf16.msra.mxu0 %v522
    %869 = vmatprep.subr.bf16.mxu0 0
    %870 = vmatpush1.bf16.msra.mxu0 %v523
    %871 = vmatprep.subr.bf16.mxu0 0
    %872 = vmatpush1.bf16.msra.mxu0 %v524
    %873 = vmatprep.subr.bf16.mxu0 0
    %874 = vmatpush1.bf16.msra.mxu0 %v525
    %875 = vmatprep.subr.bf16.mxu0 0
    %876 = vmatpush1.bf16.msra.mxu0 %v526
    %877 = vmatprep.subr.bf16.mxu0 0
    %878 = vmatpush1.bf16.msra.mxu0 %v527
    %879 = vmatprep.subr.bf16.mxu0 0
    %880 = vmatpush1.bf16.msra.mxu0 %v528
    %881 = vmatprep.subr.bf16.mxu0 0
    %882 = vmatpush1.bf16.msra.mxu0 %v529
    %883 = vmatprep.subr.bf16.mxu0 0
    %884 = vmatpush1.bf16.msra.mxu0 %v530
    %885 = vmatprep.subr.bf16.mxu0 0
    %886 = vmatpush1.bf16.msra.mxu0 %v531
    %887 = vmatprep.subr.bf16.mxu0 0
    %888 = vmatpush1.bf16.msra.mxu0 %v532
    %889 = vmatprep.subr.bf16.mxu0 0
    %890 = vmatpush1.bf16.msra.mxu0 %v533
    %891 = vmatprep.subr.bf16.mxu0 0
    %892 = vmatpush1.bf16.msra.mxu0 %v534
    %893 = vmatprep.mubr.bf16.mxu0 %v854
    %894 = vmatmul.mubr.bf16.gmra.mrb[0].mxu0 %v853
    %v895 = vpop.f32.mrb[0].mxu0
    %v896 = vadd.f32 %v261, %v895
    %v897 = vpop.f32.mrb[0].mxu0
    %v898 = vpop.f32.mrb[0].mxu0
    %v899 = vpop.f32.mrb[0].mxu0
    %900 = vdwg.mxu0
    %901 = vmatprep.subr.bf16.mxu0 0
    %902 = vmatpush1.bf16.msra.mxu0 %v535
    %903 = vmatprep.subr.bf16.mxu0 0
    %904 = vmatpush1.bf16.msra.mxu0 %v536
    %905 = vmatprep.subr.bf16.mxu0 0
    %906 = vmatpush1.bf16.msra.mxu0 %v537
    %907 = vmatprep.subr.bf16.mxu0 0
    %908 = vmatpush1.bf16.msra.mxu0 %v538
    %909 = vmatprep.subr.bf16.mxu0 0
    %910 = vmatpush1.bf16.msra.mxu0 %v539
    %911 = vmatprep.subr.bf16.mxu0 0
    %912 = vmatpush1.bf16.msra.mxu0 %v540
    %913 = vmatprep.subr.bf16.mxu0 0
    %914 = vmatpush1.bf16.msra.mxu0 %v541
    %915 = vmatprep.subr.bf16.mxu0 0
    %916 = vmatpush1.bf16.msra.mxu0 %v542
    %917 = vmatprep.subr.bf16.mxu0 0
    %918 = vmatpush1.bf16.msra.mxu0 %v543
    %919 = vmatprep.subr.bf16.mxu0 0
    %920 = vmatpush1.bf16.msra.mxu0 %v544
    %921 = vmatprep.subr.bf16.mxu0 0
    %922 = vmatpush1.bf16.msra.mxu0 %v545
    %923 = vmatprep.subr.bf16.mxu0 0
    %924 = vmatpush1.bf16.msra.mxu0 %v546
    %925 = vmatprep.subr.bf16.mxu0 0
    %926 = vmatpush1.bf16.msra.mxu0 %v547
    %927 = vmatprep.subr.bf16.mxu0 0
    %928 = vmatpush1.bf16.msra.mxu0 %v548
    %929 = vmatprep.subr.bf16.mxu0 0
    %930 = vmatpush1.bf16.msra.mxu0 %v549
    %931 = vmatprep.subr.bf16.mxu0 0
    %932 = vmatpush1.bf16.msra.mxu0 %v550
    %933 = vmatprep.mubr.bf16.mxu0 %v856
    %934 = vmatmul.mubr.bf16.gmra.mrb[0].mxu0 %v855
    %v935 = vpop.f32.mrb[0].mxu0
    %v936 = vadd.f32 %v896, %v935
    %v937 = vpop.f32.mrb[0].mxu0
    %v938 = vpop.f32.mrb[0].mxu0
    %v939 = vpop.f32.mrb[0].mxu0
    %940 = vdwg.mxu0
    %941 = vmatprep.subr.bf16.mxu0 0
    %942 = vmatpush1.bf16.msra.mxu0 %v551
    %943 = vmatprep.subr.bf16.mxu0 0
    %944 = vmatpush1.bf16.msra.mxu0 %v552
    %945 = vmatprep.subr.bf16.mxu0 0
    %946 = vmatpush1.bf16.msra.mxu0 %v553
    %947 = vmatprep.subr.bf16.mxu0 0
    %948 = vmatpush1.bf16.msra.mxu0 %v554
    %949 = vmatprep.subr.bf16.mxu0 0
    %950 = vmatpush1.bf16.msra.mxu0 %v555
    %951 = vmatprep.subr.bf16.mxu0 0
    %952 = vmatpush1.bf16.msra.mxu0 %v556
    %953 = vmatprep.subr.bf16.mxu0 0
    %954 = vmatpush1.bf16.msra.mxu0 %v557
    %955 = vmatprep.subr.bf16.mxu0 0
    %956 = vmatpush1.bf16.msra.mxu0 %v558
    %957 = vmatprep.subr.bf16.mxu0 0
    %958 = vmatpush1.bf16.msra.mxu0 %v559
    %959 = vmatprep.subr.bf16.mxu0 0
    %960 = vmatpush1.bf16.msra.mxu0 %v560
    %961 = vmatprep.subr.bf16.mxu0 0
    %962 = vmatpush1.bf16.msra.mxu0 %v561
    %963 = vmatprep.subr.bf16.mxu0 0
    %964 = vmatpush1.bf16.msra.mxu0 %v562
    %965 = vmatprep.subr.bf16.mxu0 0
    %966 = vmatpush1.bf16.msra.mxu0 %v563
    %967 = vmatprep.subr.bf16.mxu0 0
    %968 = vmatpush1.bf16.msra.mxu0 %v564
    %969 = vmatprep.subr.bf16.mxu0 0
    %970 = vmatpush1.bf16.msra.mxu0 %v565
    %971 = vmatprep.subr.bf16.mxu0 0
    %972 = vmatpush1.bf16.msra.mxu0 %v566
    %973 = vmatprep.mubr.bf16.mxu0 %v858
    %974 = vmatmul.mubr.bf16.gmra.mrb[0].mxu0 %v857
    %v975 = vpop.f32.mrb[0].mxu0
    %v976 = vadd.f32 %v936, %v975
    %v977 = vpop.f32.mrb[0].mxu0
    %v978 = vpop.f32.mrb[0].mxu0
    %v979 = vpop.f32.mrb[0].mxu0
    %980 = vdwg.mxu0
    %981 = vmatprep.subr.bf16.mxu0 0
    %982 = vmatpush1.bf16.msra.mxu0 %v567
    %983 = vmatprep.subr.bf16.mxu0 0
    %984 = vmatpush1.bf16.msra.mxu0 %v568
    %985 = vmatprep.subr.bf16.mxu0 0
    %986 = vmatpush1.bf16.msra.mxu0 %v569
    %987 = vmatprep.subr.bf16.mxu0 0
    %988 = vmatpush1.bf16.msra.mxu0 %v570
    %989 = vmatprep.subr.bf16.mxu0 0
    %990 = vmatpush1.bf16.msra.mxu0 %v571
    %991 = vmatprep.subr.bf16.mxu0 0
    %992 = vmatpush1.bf16.msra.mxu0 %v572
    %993 = vmatprep.subr.bf16.mxu0 0
    %994 = vmatpush1.bf16.msra.mxu0 %v573
    %995 = vmatprep.subr.bf16.mxu0 0
    %996 = vmatpush1.bf16.msra.mxu0 %v574
    %997 = vmatprep.subr.bf16.mxu0 0
    %998 = vmatpush1.bf16.msra.mxu0 %v575
    %999 = vmatprep.subr.bf16.mxu0 0
    %1000 = vmatpush1.bf16.msra.mxu0 %v576
    %1001 = vmatprep.subr.bf16.mxu0 0
    %1002 = vmatpush1.bf16.msra.mxu0 %v577
    %1003 = vmatprep.subr.bf16.mxu0 0
    %1004 = vmatpush1.bf16.msra.mxu0 %v578
    %1005 = vmatprep.subr.bf16.mxu0 0
    %1006 = vmatpush1.bf16.msra.mxu0 %v579
    %1007 = vmatprep.subr.bf16.mxu0 0
    %1008 = vmatpush1.bf16.msra.mxu0 %v580
    %1009 = vmatprep.subr.bf16.mxu0 0
    %1010 = vmatpush1.bf16.msra.mxu0 %v581
    %1011 = vmatprep.subr.bf16.mxu0 0
    %1012 = vmatpush1.bf16.msra.mxu0 %v582
    %1013 = vmatprep.mubr.bf16.mxu0 %v860
    %1014 = vmatmul.mubr.bf16.gmra.mrb[0].mxu0 %v859
    %v1015 = vpop.f32.mrb[0].mxu0
    %v1016 = vadd.f32 %v976, %v1015
    %v1017 = vpop.f32.mrb[0].mxu0
    %v1018 = vpop.f32.mrb[0].mxu0
    %v1019 = vpop.f32.mrb[0].mxu0
    %1020 = vdwg.mxu0
    %v1021 = vld [vmem:[#allocation7] sm:$0xff]
    %v1022 = vld [vmem:[#allocation7 + $0x8] sm:$0xff]
    %v1025 = vcombine.high %v1021, %v1021
    %v1027 = vunpack.c.l.s4 1983009808
    %v1028 = vunpack.c.0.s8 %v1027
    %v1029 = vlaneseq
    %v1030 = vshrl.u32 %v1029, 7
    %v1031 = vsub.s32 %v1028, %v1030
    %v1032 = vrot.slane %v1021, %v1031
    %v1034 = vunpack.c.l.s4 1983009808
    %v1035 = vunpack.c.0.s8 %v1034
    %v1036 = vlaneseq
    %v1037 = vshrl.u32 %v1036, 7
    %v1038 = vsub.s32 %v1035, %v1037
    %v1039 = vrot.slane %v1025, %v1038
    %v1040 = vcombine.high %v1032, %v1032
    %v1041 = vcombine.high %v1039, %v1039
    %v1042 = vcombine.high %v1022, %v1022
    %v1044 = vunpack.c.l.s4 1983009808
    %v1045 = vunpack.c.0.s8 %v1044
    %v1046 = vlaneseq
    %v1047 = vshrl.u32 %v1046, 7
    %v1048 = vsub.s32 %v1045, %v1047
    %v1049 = vrot.slane %v1022, %v1048
    %v1051 = vunpack.c.l.s4 1983009808
    %v1052 = vunpack.c.0.s8 %v1051
    %v1053 = vlaneseq
    %v1054 = vshrl.u32 %v1053, 7
    %v1055 = vsub.s32 %v1052, %v1054
    %v1056 = vrot.slane %v1042, %v1055
    %v1057 = vcombine.high %v1049, %v1049
    %v1058 = vcombine.high %v1056, %v1056
    %v1067 = vpack.c.bf16 %v1032, %v1032
    %v1068 = vpack.c.bf16 %v1040, %v1040
    %v1069 = vpack.c.bf16 %v1039, %v1039
    %v1070 = vpack.c.bf16 %v1041, %v1041
    %v1071 = vpack.c.bf16 %v1049, %v1049
    %v1072 = vpack.c.bf16 %v1057, %v1057
    %v1073 = vpack.c.bf16 %v1056, %v1056
    %v1074 = vpack.c.bf16 %v1058, %v1058
    %1075 = vmatprep.subr.bf16.mxu0 0
    %1076 = vmatpush1.bf16.msra.mxu0 %v519
    %1077 = vmatprep.subr.bf16.mxu0 0
    %1078 = vmatpush1.bf16.msra.mxu0 %v520
    %1079 = vmatprep.subr.bf16.mxu0 0
    %1080 = vmatpush1.bf16.msra.mxu0 %v521
    %1081 = vmatprep.subr.bf16.mxu0 0
    %1082 = vmatpush1.bf16.msra.mxu0 %v522
    %1083 = vmatprep.subr.bf16.mxu0 0
    %1084 = vmatpush1.bf16.msra.mxu0 %v523
    %1085 = vmatprep.subr.bf16.mxu0 0
    %1086 = vmatpush1.bf16.msra.mxu0 %v524
    %1087 = vmatprep.subr.bf16.mxu0 0
    %1088 = vmatpush1.bf16.msra.mxu0 %v525
    %1089 = vmatprep.subr.bf16.mxu0 0
    %1090 = vmatpush1.bf16.msra.mxu0 %v526
    %1091 = vmatprep.subr.bf16.mxu0 0
    %1092 = vmatpush1.bf16.msra.mxu0 %v527
    %1093 = vmatprep.subr.bf16.mxu0 0
    %1094 = vmatpush1.bf16.msra.mxu0 %v528
    %1095 = vmatprep.subr.bf16.mxu0 0
    %1096 = vmatpush1.bf16.msra.mxu0 %v529
    %1097 = vmatprep.subr.bf16.mxu0 0
    %1098 = vmatpush1.bf16.msra.mxu0 %v530
    %1099 = vmatprep.subr.bf16.mxu0 0
    %1100 = vmatpush1.bf16.msra.mxu0 %v531
    %1101 = vmatprep.subr.bf16.mxu0 0
    %1102 = vmatpush1.bf16.msra.mxu0 %v532
    %1103 = vmatprep.subr.bf16.mxu0 0
    %1104 = vmatpush1.bf16.msra.mxu0 %v533
    %1105 = vmatprep.subr.bf16.mxu0 0
    %1106 = vmatpush1.bf16.msra.mxu0 %v534
    %1107 = vmatprep.mubr.bf16.mxu0 %v1068
    %1108 = vmatmul.mubr.bf16.gmra.mrb[0].mxu0 %v1067
    %v1109 = vpop.f32.mrb[0].mxu0
    %v1110 = vadd.f32 %v261, %v1109
    %v1111 = vpop.f32.mrb[0].mxu0
    %v1112 = vpop.f32.mrb[0].mxu0
    %v1113 = vpop.f32.mrb[0].mxu0
    %1114 = vdwg.mxu0
    %1115 = vmatprep.subr.bf16.mxu0 0
    %1116 = vmatpush1.bf16.msra.mxu0 %v535
    %1117 = vmatprep.subr.bf16.mxu0 0
    %1118 = vmatpush1.bf16.msra.mxu0 %v536
    %1119 = vmatprep.subr.bf16.mxu0 0
    %1120 = vmatpush1.bf16.msra.mxu0 %v537
    %1121 = vmatprep.subr.bf16.mxu0 0
    %1122 = vmatpush1.bf16.msra.mxu0 %v538
    %1123 = vmatprep.subr.bf16.mxu0 0
    %1124 = vmatpush1.bf16.msra.mxu0 %v539
    %1125 = vmatprep.subr.bf16.mxu0 0
    %1126 = vmatpush1.bf16.msra.mxu0 %v540
    %1127 = vmatprep.subr.bf16.mxu0 0
    %1128 = vmatpush1.bf16.msra.mxu0 %v541
    %1129 = vmatprep.subr.bf16.mxu0 0
    %1130 = vmatpush1.bf16.msra.mxu0 %v542
    %1131 = vmatprep.subr.bf16.mxu0 0
    %1132 = vmatpush1.bf16.msra.mxu0 %v543
    %1133 = vmatprep.subr.bf16.mxu0 0
    %1134 = vmatpush1.bf16.msra.mxu0 %v544
    %1135 = vmatprep.subr.bf16.mxu0 0
    %1136 = vmatpush1.bf16.msra.mxu0 %v545
    %1137 = vmatprep.subr.bf16.mxu0 0
    %1138 = vmatpush1.bf16.msra.mxu0 %v546
    %1139 = vmatprep.subr.bf16.mxu0 0
    %1140 = vmatpush1.bf16.msra.mxu0 %v547
    %1141 = vmatprep.subr.bf16.mxu0 0
    %1142 = vmatpush1.bf16.msra.mxu0 %v548
    %1143 = vmatprep.subr.bf16.mxu0 0
    %1144 = vmatpush1.bf16.msra.mxu0 %v549
    %1145 = vmatprep.subr.bf16.mxu0 0
    %1146 = vmatpush1.bf16.msra.mxu0 %v550
    %1147 = vmatprep.mubr.bf16.mxu0 %v1070
    %1148 = vmatmul.mubr.bf16.gmra.mrb[0].mxu0 %v1069
    %v1149 = vpop.f32.mrb[0].mxu0
    %v1150 = vadd.f32 %v1110, %v1149
    %v1151 = vpop.f32.mrb[0].mxu0
    %v1152 = vpop.f32.mrb[0].mxu0
    %v1153 = vpop.f32.mrb[0].mxu0
    %1154 = vdwg.mxu0
    %1155 = vmatprep.subr.bf16.mxu0 0
    %1156 = vmatpush1.bf16.msra.mxu0 %v551
    %1157 = vmatprep.subr.bf16.mxu0 0
    %1158 = vmatpush1.bf16.msra.mxu0 %v552
    %1159 = vmatprep.subr.bf16.mxu0 0
    %1160 = vmatpush1.bf16.msra.mxu0 %v553
    %1161 = vmatprep.subr.bf16.mxu0 0
    %1162 = vmatpush1.bf16.msra.mxu0 %v554
    %1163 = vmatprep.subr.bf16.mxu0 0
    %1164 = vmatpush1.bf16.msra.mxu0 %v555
    %1165 = vmatprep.subr.bf16.mxu0 0
    %1166 = vmatpush1.bf16.msra.mxu0 %v556
    %1167 = vmatprep.subr.bf16.mxu0 0
    %1168 = vmatpush1.bf16.msra.mxu0 %v557
    %1169 = vmatprep.subr.bf16.mxu0 0
    %1170 = vmatpush1.bf16.msra.mxu0 %v558
    %1171 = vmatprep.subr.bf16.mxu0 0
    %1172 = vmatpush1.bf16.msra.mxu0 %v559
    %1173 = vmatprep.subr.bf16.mxu0 0
    %1174 = vmatpush1.bf16.msra.mxu0 %v560
    %1175 = vmatprep.subr.bf16.mxu0 0
    %1176 = vmatpush1.bf16.msra.mxu0 %v561
    %1177 = vmatprep.subr.bf16.mxu0 0
    %1178 = vmatpush1.bf16.msra.mxu0 %v562
    %1179 = vmatprep.subr.bf16.mxu0 0
    %1180 = vmatpush1.bf16.msra.mxu0 %v563
    %1181 = vmatprep.subr.bf16.mxu0 0
    %1182 = vmatpush1.bf16.msra.mxu0 %v564
    %1183 = vmatprep.subr.bf16.mxu0 0
    %1184 = vmatpush1.bf16.msra.mxu0 %v565
    %1185 = vmatprep.subr.bf16.mxu0 0
    %1186 = vmatpush1.bf16.msra.mxu0 %v566
    %1187 = vmatprep.mubr.bf16.mxu0 %v1072
    %1188 = vmatmul.mubr.bf16.gmra.mrb[0].mxu0 %v1071
    %v1189 = vpop.f32.mrb[0].mxu0
    %v1190 = vadd.f32 %v1150, %v1189
    %v1191 = vpop.f32.mrb[0].mxu0
    %v1192 = vpop.f32.mrb[0].mxu0
    %v1193 = vpop.f32.mrb[0].mxu0
    %1194 = vdwg.mxu0
    %1195 = vmatprep.subr.bf16.mxu0 0
    %1196 = vmatpush1.bf16.msra.mxu0 %v567
    %1197 = vmatprep.subr.bf16.mxu0 0
    %1198 = vmatpush1.bf16.msra.mxu0 %v568
    %1199 = vmatprep.subr.bf16.mxu0 0
    %1200 = vmatpush1.bf16.msra.mxu0 %v569
    %1201 = vmatprep.subr.bf16.mxu0 0
    %1202 = vmatpush1.bf16.msra.mxu0 %v570
    %1203 = vmatprep.subr.bf16.mxu0 0
    %1204 = vmatpush1.bf16.msra.mxu0 %v571
    %1205 = vmatprep.subr.bf16.mxu0 0
    %1206 = vmatpush1.bf16.msra.mxu0 %v572
    %1207 = vmatprep.subr.bf16.mxu0 0
    %1208 = vmatpush1.bf16.msra.mxu0 %v573
    %1209 = vmatprep.subr.bf16.mxu0 0
    %1210 = vmatpush1.bf16.msra.mxu0 %v574
    %1211 = vmatprep.subr.bf16.mxu0 0
    %1212 = vmatpush1.bf16.msra.mxu0 %v575
    %1213 = vmatprep.subr.bf16.mxu0 0
    %1214 = vmatpush1.bf16.msra.mxu0 %v576
    %1215 = vmatprep.subr.bf16.mxu0 0
    %1216 = vmatpush1.bf16.msra.mxu0 %v577
    %1217 = vmatprep.subr.bf16.mxu0 0
    %1218 = vmatpush1.bf16.msra.mxu0 %v578
    %1219 = vmatprep.subr.bf16.mxu0 0
    %1220 = vmatpush1.bf16.msra.mxu0 %v579
    %1221 = vmatprep.subr.bf16.mxu0 0
    %1222 = vmatpush1.bf16.msra.mxu0 %v580
    %1223 = vmatprep.subr.bf16.mxu0 0
    %1224 = vmatpush1.bf16.msra.mxu0 %v581
    %1225 = vmatprep.subr.bf16.mxu0 0
    %1226 = vmatpush1.bf16.msra.mxu0 %v582
    %1227 = vmatprep.mubr.bf16.mxu0 %v1074
    %1228 = vmatmul.mubr.bf16.gmra.mrb[0].mxu0 %v1073
    %v1229 = vpop.f32.mrb[0].mxu0
    %v1230 = vadd.f32 %v1190, %v1229
    %v1231 = vpop.f32.mrb[0].mxu0
    %v1232 = vpop.f32.mrb[0].mxu0
    %v1233 = vpop.f32.mrb[0].mxu0
    %1234 = vdwg.mxu0
    %v1235 = vld [vmem:[%s5] sm:$0x3]
    %v1236 = vmax.f32 %v1235, 0.0
    %v1237 = vmul.f32 %v802, %v1236
    %v1238 = vmul.f32 %v1016, %v1236
    %v1239 = vmul.f32 %v1230, %v1236
    %v1240 = vlaneseq
    %v1241 = vand.u32 %v1240, 127
    %vm1242 = vcmp.lt.s32.totalorder %v1241, 128
    %v1243 = vsub.f32 %v1237, %v1238
    %v1244 = vadd.f32 %v1243, 1e-06
    %v1245 = vsel %vm1242, %v1244, 0.0
    %v1246 = vsub.f32 %v1237, %v1239
    %v1247 = vadd.f32 %v1246, 1e-06
    %v1248 = vsel %vm1242, %v1247, 0.0
    %v1249 = vmul.f32 %v1245, %v1245
    %vm1250 = vcmask 1041408
    %v1251 = vsel %vm1250, %v1249, 0.0
    %1252 = vadd.xlane.f32.xlu0 %v1251
    %v1253 = vpop.xlane.xlu0 %1252
    %v1254 = vrsqrt.pop %v1253
    %v1255 = vmul.f32 %v1253, %v1254
    %vm1256 = vcmp.eq.f32.partialorder %v1253, inf
    %v1257 = vsel %vm1256, %v1253, %v1255
    %vm1258 = vcmp.eq.f32.partialorder %v1253, 0.0
    %v1259 = vand.u32 %v1253, 2147483648
    %v1260 = vsel %vm1258, %v1259, %v1257
    %v1261 = vmul.f32 %v1248, %v1248
    %v1262 = vsel %vm1250, %v1261, 0.0
    %1263 = vadd.xlane.f32.xlu0 %v1262
    %v1264 = vpop.xlane.xlu0 %1263
    %v1265 = vrsqrt.pop %v1264
    %v1266 = vmul.f32 %v1264, %v1265
    %vm1267 = vcmp.eq.f32.partialorder %v1264, inf
    %v1268 = vsel %vm1267, %v1264, %v1266
    %vm1269 = vcmp.eq.f32.partialorder %v1264, 0.0
    %v1270 = vand.u32 %v1264, 2147483648
    %v1271 = vsel %vm1269, %v1270, %v1268
    %v1272 = vand.u32 2147483647, %v1236
    %v1273 = vsel %vm1250, %v1272, 0.0
    %1274 = vadd.xlane.f32.xlu0 %v1273
    %v1275 = vpop.xlane.xlu0 %1274
    %v1276 = vrot.slane %v1275, 4
    %v1277 = vadd.f32 %v1275, %v1276
    %v1278 = vrot.slane %v1277, 2
    %v1279 = vadd.f32 %v1277, %v1278
    %v1280 = vrot.slane %v1279, 1
    %v1281 = vadd.f32 %v1279, %v1280
    %s1282 = vtos %v1281
    %v1283 = vmul.f32 %v802, %v802
    %v1284 = vsel %vm1250, %v1283, 0.0
    %1285 = vadd.xlane.f32.xlu0 %v1284
    %v1286 = vpop.xlane.xlu0 %1285
    %v1287 = vrot.slane %v1286, 4
    %v1288 = vadd.f32 %v1286, %v1287
    %v1289 = vrot.slane %v1288, 2
    %v1290 = vadd.f32 %v1288, %v1289
    %v1291 = vrot.slane %v1290, 1
    %v1292 = vadd.f32 %v1290, %v1291
    %s1293 = vtos %v1292
    %v1294 = vstv %s1293
    %v1295 = vrsqrt.pop %v1294
    %v1296 = vmul.f32 %v1294, %v1295
    %vm1297 = vcmp.eq.f32.partialorder %v1294, inf
    %v1298 = vsel %vm1297, %v1294, %v1296
    %vm1299 = vcmp.eq.f32.partialorder %v1294, 0.0
    %v1300 = vand.u32 %v1294, 2147483648
    %v1301 = vsel %vm1299, %v1300, %v1298
    %s1302 = vtos %v1301
    %v1303 = vmul.f32 %v1016, %v1016
    %v1304 = vsel %vm1250, %v1303, 0.0
    %1305 = vadd.xlane.f32.xlu0 %v1304
    %v1306 = vpop.xlane.xlu0 %1305
    %v1307 = vrot.slane %v1306, 4
    %v1308 = vadd.f32 %v1306, %v1307
    %v1309 = vrot.slane %v1308, 2
    %v1310 = vadd.f32 %v1308, %v1309
    %v1311 = vrot.slane %v1310, 1
    %v1312 = vadd.f32 %v1310, %v1311
    %s1313 = vtos %v1312
    %v1314 = vstv %s1313
    %v1315 = vrsqrt.pop %v1314
    %v1316 = vmul.f32 %v1314, %v1315
    %vm1317 = vcmp.eq.f32.partialorder %v1314, inf
    %v1318 = vsel %vm1317, %v1314, %v1316
    %vm1319 = vcmp.eq.f32.partialorder %v1314, 0.0
    %v1320 = vand.u32 %v1314, 2147483648
    %v1321 = vsel %vm1319, %v1320, %v1318
    %s1322 = vtos %v1321
    %s1323 = sadd.f32 %s1302, %s1322
    %v1324 = vmul.f32 %v1230, %v1230
    %v1325 = vsel %vm1250, %v1324, 0.0
    %1326 = vadd.xlane.f32.xlu0 %v1325
    %v1327 = vpop.xlane.xlu0 %1326
    %v1328 = vrot.slane %v1327, 4
    %v1329 = vadd.f32 %v1327, %v1328
    %v1330 = vrot.slane %v1329, 2
    %v1331 = vadd.f32 %v1329, %v1330
    %v1332 = vrot.slane %v1331, 1
    %v1333 = vadd.f32 %v1331, %v1332
    %s1334 = vtos %v1333
    %v1335 = vstv %s1334
    %v1336 = vrsqrt.pop %v1335
    %v1337 = vmul.f32 %v1335, %v1336
    %vm1338 = vcmp.eq.f32.partialorder %v1335, inf
    %v1339 = vsel %vm1338, %v1335, %v1337
    %vm1340 = vcmp.eq.f32.partialorder %v1335, 0.0
    %v1341 = vand.u32 %v1335, 2147483648
    %v1342 = vsel %vm1340, %v1341, %v1339
    %s1343 = vtos %v1342
    %s1344 = sadd.f32 %s1323, %s1343
    %v1345 = vrcp.pop 3.0
    %s1346 = vtos %v1345
    %s1347 = smul.f32 %s1344, %s1346
    %v1348 = vmul.f32 %v1237, %v1237
    %v1349 = vsel %vm1250, %v1348, 0.0
    %1350 = vadd.xlane.f32.xlu0 %v1349
    %v1351 = vpop.xlane.xlu0 %1350
    %v1352 = vrot.slane %v1351, 4
    %v1353 = vadd.f32 %v1351, %v1352
    %v1354 = vrot.slane %v1353, 2
    %v1355 = vadd.f32 %v1353, %v1354
    %v1356 = vrot.slane %v1355, 1
    %v1357 = vadd.f32 %v1355, %v1356
    %s1358 = vtos %v1357
    %v1359 = vstv %s1358
    %v1360 = vrsqrt.pop %v1359
    %v1361 = vmul.f32 %v1359, %v1360
    %vm1362 = vcmp.eq.f32.partialorder %v1359, inf
    %v1363 = vsel %vm1362, %v1359, %v1361
    %vm1364 = vcmp.eq.f32.partialorder %v1359, 0.0
    %v1365 = vand.u32 %v1359, 2147483648
    %v1366 = vsel %vm1364, %v1365, %v1363
    %s1367 = vtos %v1366
    %v1368 = vmul.f32 %v1238, %v1238
    %v1369 = vsel %vm1250, %v1368, 0.0
    %1370 = vadd.xlane.f32.xlu0 %v1369
    %v1371 = vpop.xlane.xlu0 %1370
    %v1372 = vrot.slane %v1371, 4
    %v1373 = vadd.f32 %v1371, %v1372
    %v1374 = vrot.slane %v1373, 2
    %v1375 = vadd.f32 %v1373, %v1374
    %v1376 = vrot.slane %v1375, 1
    %v1377 = vadd.f32 %v1375, %v1376
    %s1378 = vtos %v1377
    %v1379 = vstv %s1378
    %v1380 = vrsqrt.pop %v1379
    %v1381 = vmul.f32 %v1379, %v1380
    %vm1382 = vcmp.eq.f32.partialorder %v1379, inf
    %v1383 = vsel %vm1382, %v1379, %v1381
    %vm1384 = vcmp.eq.f32.partialorder %v1379, 0.0
    %v1385 = vand.u32 %v1379, 2147483648
    %v1386 = vsel %vm1384, %v1385, %v1383
    %s1387 = vtos %v1386
    %s1388 = sadd.f32 %s1367, %s1387
    %v1389 = vmul.f32 %v1239, %v1239
    %v1390 = vsel %vm1250, %v1389, 0.0
    %1391 = vadd.xlane.f32.xlu0 %v1390
    %v1392 = vpop.xlane.xlu0 %1391
    %v1393 = vrot.slane %v1392, 4
    %v1394 = vadd.f32 %v1392, %v1393
    %v1395 = vrot.slane %v1394, 2
    %v1396 = vadd.f32 %v1394, %v1395
    %v1397 = vrot.slane %v1396, 1
    %v1398 = vadd.f32 %v1396, %v1397
    %s1399 = vtos %v1398
    %v1400 = vstv %s1399
    %v1401 = vrsqrt.pop %v1400
    %v1402 = vmul.f32 %v1400, %v1401
    %vm1403 = vcmp.eq.f32.partialorder %v1400, inf
    %v1404 = vsel %vm1403, %v1400, %v1402
    %vm1405 = vcmp.eq.f32.partialorder %v1400, 0.0
    %v1406 = vand.u32 %v1400, 2147483648
    %v1407 = vsel %vm1405, %v1406, %v1404
    %s1408 = vtos %v1407
    %s1409 = sadd.f32 %s1388, %s1408
    %v1410 = vrcp.pop 3.0
    %s1411 = vtos %v1410
    %s1412 = smul.f32 %s1409, %s1411
    %vm1413 = vcmp.eq.s32.totalorder %v1241, 0
    %vm1414 = vcmp.eq.s32.totalorder %v1241, 1
    %vm1415 = vcmp.eq.s32.totalorder %v1241, 2
    %vm1416 = vcmp.eq.s32.totalorder %v1241, 3
    %vm1417 = vcmp.eq.s32.totalorder %v1241, 4
    %v1418 = vstv %s1412
    %v1419 = vsel %vm1417, %v1418, 0.0
    %v1420 = vstv %s1347
    %v1421 = vsel %vm1416, %v1420, %v1419
    %v1422 = vstv %s1282
    %v1423 = vsel %vm1415, %v1422, %v1421
    %v1424 = vsel %vm1414, %v1271, %v1423
    %v1425 = vsel %vm1413, %v1260, %v1424
    %1426 = vst [vmem:[#allocation10] sm:$0x3] %v1425
    // Predicated region
    $region42: #{tpu_custom_call.1} parent=1 // pred_check
      _
    $region43: #{tpu_custom_call.1} parent=1 // pred_check_branch
      %1428 = sbr.rel (0) target = $region45
    $region44: #{tpu_custom_call.1} parent=1 // pred_region
      %s1430 = ssub.s32 32, 32
      %1431 = vsyncadd [#allocation4], %s1430
      %s1433 = sshll.u32 [#allocation10], 4
      %s1434 = int_to_ptr.vmem [resolvable:$true] %s1433
      %1436 = dma.vmem_to_hbm [thread:$0]  %s1434, 32, %s6, [#allocation4]
    $region45: #{tpu_custom_call.1} parent=1 // pred_fallthru
      _
    // Predicated region
    $region46: #{tpu_custom_call.1} parent=1 // pred_check
      _
    $region47: #{tpu_custom_call.1} parent=1 // pred_check_branch
      %1438 = sbr.rel (0) target = $region49
    $region48: #{tpu_custom_call.1} parent=1 // pred_region
      %1439 = dma.done [#allocation4], 32
    $region49: #{tpu_custom_call.1} parent=1 // pred_fallthru
      _
    %1440 = vsyncpa [#allocation3], 1
    %1441 = vsyncpa [#allocation6], 1
    %1442 = vsyncpa [#allocation9], 1
    %1443 = vsyncpa [#allocation4], 1

</llo_original>
